<compile_context>
chip_gen: v7x
topology: tpu7x:2x2x1
jax: 0.10.0
libtpu: 0.0.40
codegen_flags: <defaults>
</compile_context>

<pallas_src>
import jax
import jax.numpy as jnp
from jax.experimental import pallas as pl
from jax.experimental.pallas import tpu as pltpu

STATE_DIM = 32
H1 = 512
H2 = 256
OUT = 1


def _round_up(x, m):
    return ((x + m - 1) // m) * m


def critic_kernel(x_ref, w1_ref, b1_ref, w2_ref, b2_ref, w3_ref, b3_ref, o_ref):
    # Layer 1: Linear(state_dim, 512) + ReLU.
    # f32 -> bf16 cast happens here (free filler on the VALU) instead of as a
    # separate XLA op in the wrapper (saves an HBM round trip over x).
    x = x_ref[...].astype(jnp.bfloat16)
    h1 = jnp.dot(x, w1_ref[...], preferred_element_type=jnp.float32)
    h1 = jnp.maximum(h1 + b1_ref[...], 0.0)

    # Dropout(0.25): identity at inference time (eval mode).
    # TODO(synk): training-mode dropout (pltpu.prng_seed + prng_random_bits
    # mask) not implemented.

    # Layer 2: Linear(512, 256) + ReLU.  bf16 MXU inputs, f32 accumulation.
    h2 = jnp.dot(h1.astype(jnp.bfloat16), w2_ref[...],
                 preferred_element_type=jnp.float32)
    h2 = jnp.maximum(h2 + b2_ref[...], 0.0)

    # Layer 3: Linear(256, 1) as a VPU multiply + lane reduction (w3 stored as
    # (1, 256), PyTorch's native layout for Linear(256, 1)).  The (tb, 1)
    # column is transposed to a lane-dense (1, tb) row so the output store is
    # unmasked and the writeback DMA is contiguous.  b3 is an SMEM scalar.
    o_col = jnp.sum(h2 * w3_ref[...], axis=-1, keepdims=True)     # (tb, 1)
    o_row = o_col.T + b3_ref[0, 0]                                # (1, tb)
    o_ref[...] = o_row.astype(o_ref.dtype)


def critic_forward(x, w1, b1, w2, b2, w3, b3, *, tb=None):
    """x: (B, state_dim) f32.  w1/w2: bf16 (in, out).  w3: (1, H2) f32.
    b1/b2: (1, out) f32.  b3: (1, 1) f32.  Returns (B, 1) f32."""
    B, state_dim = x.shape

    # Tile selection: big tiles (step overhead dominates otherwise), multiple
    # of 256, but capped so large batches still give >= 2 grid steps (v7x
    # megacore can then shard the "parallel" batch axis across its 2 TCs).
    if tb is None:
        tb = 1024
    tb = _round_up(min(tb, max(256, pl.cdiv(B, 2))), 256)

    num_tiles = pl.cdiv(B, tb)  # partial last block: no jnp.pad needed

    flops = 2 * B * (state_dim * H1 + H1 * H2 + H2 * OUT)
    bytes_accessed = (B * state_dim * 4                    # x (f32 in)
                      + (state_dim * H1 + H1 * H2) * 2     # bf16 weights
                      + (H1 + H2 + H2 + 1) * 4             # biases + w3
                      + num_tiles * tb * 4)                # output slab

    out = pl.pallas_call(
        critic_kernel,
        out_shape=jax.ShapeDtypeStruct((num_tiles, tb), jnp.float32),
        grid=(num_tiles,),
        in_specs=[
            # x: tiled over the batch axis (double-buffered by Pallas).
            pl.BlockSpec((tb, state_dim), lambda i: (i, 0)),
            # Weights / biases: constant block index -> VMEM-resident, DMA'd
            # once.  (pl.Buffered(1) would shave the unused second buffer
            # (~0.3 MiB); skipped as negligible at tb <= 1024.)
            pl.BlockSpec((state_dim, H1), lambda i: (0, 0)),
            pl.BlockSpec((1, H1), lambda i: (0, 0)),
            pl.BlockSpec((H1, H2), lambda i: (0, 0)),
            pl.BlockSpec((1, H2), lambda i: (0, 0)),
            pl.BlockSpec((1, H2), lambda i: (0, 0)),
            # b3 is a single scalar -> SMEM, no padded VMEM tile.
            pl.BlockSpec(memory_space=pltpu.SMEM),
        ],
        # Lane-dense output: one (1, tb) row per grid step.
        out_specs=pl.BlockSpec((1, tb), lambda i: (i, 0)),
        compiler_params=pltpu.CompilerParams(
            dimension_semantics=("parallel",),
        ),
        cost_estimate=pl.CostEstimate(
            flops=flops, transcendentals=0, bytes_accessed=bytes_accessed),
    )(x, w1, b1, w2, b2, w3, b3)

    # (num_tiles, tb) slab -> (B, 1).  Rows are independent through the MLP,
    # so the garbage rows of the partial last block are simply sliced off.
    return out.reshape(num_tiles * tb, 1)[:B]


def init_params(key, state_dim):
    """PyTorch-Linear-style init U(-1/sqrt(fan_in), 1/sqrt(fan_in)).
    w1/w2 stored as bf16, w3 as (1, H2) f32, biases f32."""
    ks = jax.random.split(key, 6)

    def lin(kw, kb, fan_in, fan_out):
        bound = 1.0 / jnp.sqrt(fan_in)
        w = jax.random.uniform(kw, (fan_in, fan_out), jnp.float32, -bound, bound)
        b = jax.random.uniform(kb, (1, fan_out), jnp.float32, -bound, bound)
        return w, b

    w1, b1 = lin(ks[0], ks[1], state_dim, H1)
    w2, b2 = lin(ks[2], ks[3], H1, H2)
    w3, b3 = lin(ks[4], ks[5], H2, OUT)
    return (
        w1.astype(jnp.bfloat16), b1,
        w2.astype(jnp.bfloat16), b2,
        w3.T,                    b3,   # w3 stored as (1, H2)
    )


def reference_forward(x, w1, b1, w2, b2, w3, b3):
    """Pure-JAX reference mimicking the kernel's bf16 compute path."""
    xb = x.astype(jnp.bfloat16).astype(jnp.float32)
    w1f = w1.astype(jnp.float32)
    w2f = w2.astype(jnp.float32)
    h1 = jnp.maximum(xb @ w1f + b1, 0.0)
    h1 = h1.astype(jnp.bfloat16).astype(jnp.float32)
    h2 = jnp.maximum(h1 @ w2f + b2, 0.0)
    return jnp.sum(h2 * w3, axis=-1, keepdims=True) + b3


if __name__ == "__main__":
    key = jax.random.PRNGKey(0)
    k_param, k_x1, k_x2 = jax.random.split(key, 3)

    params = init_params(k_param, STATE_DIM)
    fwd = jax.jit(critic_forward, static_argnames=("tb",))

    # Case 1: tiny batch -> single grid step, heavily partial block.
    B1 = 8
    x1 = jax.random.normal(k_x1, (B1, STATE_DIM), jnp.float32)
    out1 = jax.block_until_ready(fwd(x1, *params))
    ref1 = reference_forward(x1, *params)
    assert out1.shape == (B1, OUT), out1.shape
    assert jnp.allclose(out1, ref1, atol=5e-3, rtol=5e-3), (out1, ref1)

    # Case 2: batch not divisible by the tile -> multi-step grid + partial
    # last block (B=300, tb=256 -> grid=(2,)).
    B2 = 300
    x2 = jax.random.normal(k_x2, (B2, STATE_DIM), jnp.float32)
    out2 = jax.block_until_ready(fwd(x2, *params))
    ref2 = reference_forward(x2, *params)
    assert out2.shape == (B2, OUT), out2.shape
    assert jnp.allclose(out2, ref2, atol=5e-3, rtol=5e-3), (out2, ref2)

    print("KERNEL_OK")
</pallas_src>

<mosaic_0001>
module attributes {stable_mosaic.version = 11 : i64} {
  func.func @critic_kernel(%arg0: i32, %arg1: memref<256x32xf32, #tpu.memory_space<vmem>>, %arg2: memref<32x512xbf16, #tpu.memory_space<vmem>>, %arg3: memref<1x512xf32, #tpu.memory_space<vmem>>, %arg4: memref<512x256xbf16, #tpu.memory_space<vmem>>, %arg5: memref<1x256xf32, #tpu.memory_space<vmem>>, %arg6: memref<1x256xf32, #tpu.memory_space<vmem>>, %arg7: memref<1x1xf32, #tpu.memory_space<smem>>, %arg8: memref<1x256xf32, #tpu.memory_space<vmem>>) attributes {dimension_semantics = [#tpu.dimension_semantics<parallel>], iteration_bounds = array<i64: 1>, scalar_prefetch = 0 : i64, scratch_operands = 0 : i64, tpu.core_type = #tpu.core_type<tc>, window_params = [{transform_indices = @transform_0, window_bounds = array<i64: 256, 32>}, {pipeline_mode = #tpu.pipeline_mode<synchronous>, transform_indices = @transform_1, window_bounds = array<i64: 32, 512>}, {pipeline_mode = #tpu.pipeline_mode<synchronous>, transform_indices = @transform_2, window_bounds = array<i64: 1, 512>}, {pipeline_mode = #tpu.pipeline_mode<synchronous>, transform_indices = @transform_3, window_bounds = array<i64: 512, 256>}, {pipeline_mode = #tpu.pipeline_mode<synchronous>, transform_indices = @transform_4, window_bounds = array<i64: 1, 256>}, {pipeline_mode = #tpu.pipeline_mode<synchronous>, transform_indices = @transform_5, window_bounds = array<i64: 1, 256>}, {transform_indices = @transform_6, window_bounds = array<i64: 1, 1>}, {transform_indices = @transform_7, window_bounds = array<i64: 1, 256>}]} {
    %c0 = arith.constant 0 : index
    %c0_0 = arith.constant 0 : index
    %0 = vector.load %arg1[%c0, %c0_0] : memref<256x32xf32, #tpu.memory_space<vmem>>, vector<256x32xf32>
    %1 = arith.truncf %0 : vector<256x32xf32> to vector<256x32xbf16>
    %c0_1 = arith.constant 0 : index
    %c0_2 = arith.constant 0 : index
    %2 = vector.load %arg2[%c0_1, %c0_2] : memref<32x512xbf16, #tpu.memory_space<vmem>>, vector<32x512xbf16>
    %cst = arith.constant dense<0.000000e+00> : vector<256x512xf32>
    %3 = tpu.matmul %1, %2, %cst {dimension_numbers = #tpu.dot_dimension_numbers<[1], [0], [0], [1], [0, 0, 1, 1], [], []>} : vector<256x32xbf16>, vector<32x512xbf16>, vector<256x512xf32> -> vector<256x512xf32>
    %c0_3 = arith.constant 0 : index
    %c0_4 = arith.constant 0 : index
    %4 = vector.load %arg3[%c0_3, %c0_4] : memref<1x512xf32, #tpu.memory_space<vmem>>, vector<1x512xf32>
    %5 = vector.broadcast %4 : vector<1x512xf32> to vector<256x512xf32>
    %6 = arith.addf %3, %5 : vector<256x512xf32>
    %cst_5 = arith.constant 0.000000e+00 : f32
    %7 = vector.broadcast %cst_5 : f32 to vector<256x512xf32>
    %8 = arith.maximumf %6, %7 : vector<256x512xf32>
    %9 = arith.truncf %8 : vector<256x512xf32> to vector<256x512xbf16>
    %c0_6 = arith.constant 0 : index
    %c0_7 = arith.constant 0 : index
    %10 = vector.load %arg4[%c0_6, %c0_7] : memref<512x256xbf16, #tpu.memory_space<vmem>>, vector<512x256xbf16>
    %cst_8 = arith.constant dense<0.000000e+00> : vector<256x256xf32>
    %11 = tpu.matmul %9, %10, %cst_8 {dimension_numbers = #tpu.dot_dimension_numbers<[1], [0], [0], [1], [0, 0, 1, 1], [], []>} : vector<256x512xbf16>, vector<512x256xbf16>, vector<256x256xf32> -> vector<256x256xf32>
    %c0_9 = arith.constant 0 : index
    %c0_10 = arith.constant 0 : index
    %12 = vector.load %arg5[%c0_9, %c0_10] : memref<1x256xf32, #tpu.memory_space<vmem>>, vector<1x256xf32>
    %13 = vector.broadcast %12 : vector<1x256xf32> to vector<256x256xf32>
    %14 = arith.addf %11, %13 : vector<256x256xf32>
    %cst_11 = arith.constant 0.000000e+00 : f32
    %15 = vector.broadcast %cst_11 : f32 to vector<256x256xf32>
    %16 = arith.maximumf %14, %15 : vector<256x256xf32>
    %c0_12 = arith.constant 0 : index
    %c0_13 = arith.constant 0 : index
    %17 = vector.load %arg6[%c0_12, %c0_13] : memref<1x256xf32, #tpu.memory_space<vmem>>, vector<1x256xf32>
    %18 = vector.broadcast %17 : vector<1x256xf32> to vector<256x256xf32>
    %19 = arith.mulf %16, %18 : vector<256x256xf32>
    %cst_14 = arith.constant dense<0.000000e+00> : vector<256xf32>
    %20 = vector.multi_reduction <add>, %19, %cst_14 [1] : vector<256x256xf32> to vector<256xf32>
    %21 = vector.shape_cast %20 : vector<256xf32> to vector<256x1xf32>
    %22 = tpu.transpose %21, [1, 0] : vector<256x1xf32> -> vector<1x256xf32>
    %c0_15 = arith.constant 0 : index
    %c0_16 = arith.constant 0 : index
    %23 = memref.load %arg7[%c0_15, %c0_16] : memref<1x1xf32, #tpu.memory_space<smem>>
    %24 = vector.broadcast %23 : f32 to vector<1x256xf32>
    %25 = arith.addf %22, %24 : vector<1x256xf32>
    %c0_17 = arith.constant 0 : index
    %c0_18 = arith.constant 0 : index
    %26 = vector.load %arg8[%c0_17, %c0_18] : memref<1x256xf32, #tpu.memory_space<vmem>>, vector<1x256xf32>
    tpu.vector_store %arg8[%c0_17, %c0_18], %25 {strides = array<i32>} : memref<1x256xf32, #tpu.memory_space<vmem>>, vector<1x256xf32>,
    return
  }
  func.func @transform_0(%arg0: i32) -> (i32, i32) {
    %c0_i32 = arith.constant 0 : i32
    %c0_i32_0 = arith.constant 0 : i32
    return %arg0, %c0_i32 : i32, i32
  }
  func.func @transform_1(%arg0: i32) -> (i32, i32) {
    %c0_i32 = arith.constant 0 : i32
    %c0_i32_0 = arith.constant 0 : i32
    %c0_i32_1 = arith.constant 0 : i32
    return %c0_i32, %c0_i32_0 : i32, i32
  }
  func.func @transform_2(%arg0: i32) -> (i32, i32) {
    %c0_i32 = arith.constant 0 : i32
    %c0_i32_0 = arith.constant 0 : i32
    %c0_i32_1 = arith.constant 0 : i32
    return %c0_i32, %c0_i32_0 : i32, i32
  }
  func.func @transform_3(%arg0: i32) -> (i32, i32) {
    %c0_i32 = arith.constant 0 : i32
    %c0_i32_0 = arith.constant 0 : i32
    %c0_i32_1 = arith.constant 0 : i32
    return %c0_i32, %c0_i32_0 : i32, i32
  }
  func.func @transform_4(%arg0: i32) -> (i32, i32) {
    %c0_i32 = arith.constant 0 : i32
    %c0_i32_0 = arith.constant 0 : i32
    %c0_i32_1 = arith.constant 0 : i32
    return %c0_i32, %c0_i32_0 : i32, i32
  }
  func.func @transform_5(%arg0: i32) -> (i32, i32) {
    %c0_i32 = arith.constant 0 : i32
    %c0_i32_0 = arith.constant 0 : i32
    %c0_i32_1 = arith.constant 0 : i32
    return %c0_i32, %c0_i32_0 : i32, i32
  }
  func.func @transform_6(%arg0: i32) -> (i32, i32) {
    %c0_i32 = arith.constant 0 : i32
    %c0_i32_0 = arith.constant 0 : i32
    %c0_i32_1 = arith.constant 0 : i32
    return %c0_i32, %c0_i32_0 : i32, i32
  }
  func.func @transform_7(%arg0: i32) -> (i32, i32) {
    %c0_i32 = arith.constant 0 : i32
    %c0_i32_0 = arith.constant 0 : i32
    return %arg0, %c0_i32 : i32, i32
  }
}

</mosaic_0001>

<llo_original>
// kernel: critic_forward.1
$region0: #{critic_forward.1}
  #allocation0 [shape = 'u32[]', space=smem, size = 0x4, offset = 0x4, fixed_abs, tag = 'smem constant byte address 0x4 - core index']
  #allocation1 [shape = 'u32[144,128]{1,0:T(1,128)}', space=vmem, size = 0x12000, scoped, tag = 'internal scratch']
  #allocation2 [shape = 'f32[1,1]{1,0:T(1,128)S(6)}', space=smem, size = 0x200, scoped, tag = 'scoped memory for critic_forward.1']
  %s0 = inlined_call_operand.hbm [shape: f32[8,32], index: 0, kind: input, shape index: {}]
  %s1 = inlined_call_operand.hbm [shape: bf16[32,512], index: 1, kind: input, shape index: {}]
  %s2 = inlined_call_operand.vmem [shape: f32[1,512], index: 2, kind: input, shape index: {}]
  %s3 = inlined_call_operand.hbm [shape: bf16[512,256], index: 3, kind: input, shape index: {}]
  %s4 = inlined_call_operand.vmem [shape: f32[1,256], index: 4, kind: input, shape index: {}]
  %s5 = inlined_call_operand.vmem [shape: f32[1,256], index: 5, kind: input, shape index: {}]
  %s6 = inlined_call_operand.<no memory space> [shape: f32[1,1], index: 6, kind: input, shape index: {}]
  %s7 = inlined_call_operand.vmem [shape: f32[1,256], index: 7, kind: output, shape index: {}]
  %s8 = sld [smem:[#allocation0]]
  $region50: #{critic_forward.1} parent=0
    _
  %s10 = ssub.s32 1, %s8
  %s11 = scalar_select 0, %s10, %s8
  %12 = sst [smem:[#allocation2]] %s6
  $region1: #{critic_forward.1} parent=0
    #allocation3 [shape = 'u8[131072]{0}', space=vmem, size = 0x20000, scoped, tag = 'input window, operand 0, single buffered']
    #allocation4 [shape = 's32[1]{0}', space=sflag, size = 0x4, scoped, tag = 'scoped memory for critic_forward.1']
    #allocation5 [shape = 'u8[32768]{0}', space=vmem, size = 0x8000, scoped, tag = 'input window, operand 1, single buffered']
    #allocation6 [shape = 's32[1]{0}', space=sflag, size = 0x4, scoped, tag = 'scoped memory for critic_forward.1']
    #allocation7 [shape = 'u8[262144]{0}', space=vmem, size = 0x40000, scoped, tag = 'input window, operand 3, single buffered']
    %13 = vsyncpa [#allocation4], 0
    %14 = vsyncpa [#allocation6], 0
    // Predicated region
    $region2: #{critic_forward.1} parent=1 // pred_check
      _
    $region3: #{critic_forward.1} parent=1 // pred_check_branch
      %16 = sbr.rel (0) target = $region5
    $region4: #{critic_forward.1} parent=1 // pred_region
      %s18 = ssub.s32 4096, 128
      %19 = vsyncadd [#allocation4], %s18
      %s20 = sshll.u32 [#allocation3], 4
      %s21 = int_to_ptr.vmem [resolvable:$true] %s20
      %26 = dma.hbm_to_vmem [thread:$0]  %s0, 128, %s21, [#allocation4], 128, 128, 8
    $region5: #{critic_forward.1} parent=1 // pred_fallthru
      _
    // Predicated region
    $region6: #{critic_forward.1} parent=1 // pred_check
      _
    $region7: #{critic_forward.1} parent=1 // pred_check_branch
      %28 = sbr.rel (0) target = $region9
    $region8: #{critic_forward.1} parent=1 // pred_region
      %s30 = ssub.s32 1024, 1024
      %31 = vsyncadd [#allocation6], %s30
      %s32 = sshll.u32 [#allocation5], 4
      %s33 = int_to_ptr.vmem [resolvable:$true] %s32
      %38 = dma.hbm_to_vmem [thread:$0]  %s1, 1024, %s33, [#allocation6], 256, 256, 16
    $region9: #{critic_forward.1} parent=1 // pred_fallthru
      _
    // Predicated region
    $region10: #{critic_forward.1} parent=1 // pred_check
      _
    $region11: #{critic_forward.1} parent=1 // pred_check_branch
      %40 = sbr.rel (0) target = $region13
    $region12: #{critic_forward.1} parent=1 // pred_region
      _
    $region13: #{critic_forward.1} parent=1 // pred_fallthru
      _
    // Predicated region
    $region14: #{critic_forward.1} parent=1 // pred_check
      _
    $region15: #{critic_forward.1} parent=1 // pred_check_branch
      %42 = sbr.rel (0) target = $region17
    $region16: #{critic_forward.1} parent=1 // pred_region
      %s44 = ssub.s32 8192, 8192
      %45 = vsyncadd [#allocation6], %s44
      %s46 = sshll.u32 [#allocation7], 4
      %s47 = int_to_ptr.vmem [resolvable:$true] %s46
      %52 = dma.hbm_to_vmem [thread:$0]  %s3, 8192, %s47, [#allocation6], 128, 128, 8
    $region17: #{critic_forward.1} parent=1 // pred_fallthru
      _
    // Predicated region
    $region18: #{critic_forward.1} parent=1 // pred_check
      _
    $region19: #{critic_forward.1} parent=1 // pred_check_branch
      %54 = sbr.rel (0) target = $region21
    $region20: #{critic_forward.1} parent=1 // pred_region
      _
    $region21: #{critic_forward.1} parent=1 // pred_fallthru
      _
    // Predicated region
    $region22: #{critic_forward.1} parent=1 // pred_check
      _
    $region23: #{critic_forward.1} parent=1 // pred_check_branch
      %56 = sbr.rel (0) target = $region25
    $region24: #{critic_forward.1} parent=1 // pred_region
      _
    $region25: #{critic_forward.1} parent=1 // pred_fallthru
      _
    // Predicated region
    $region26: #{critic_forward.1} parent=1 // pred_check
      _
    $region27: #{critic_forward.1} parent=1 // pred_check_branch
      %58 = sbr.rel (0) target = $region29
    $region28: #{critic_forward.1} parent=1 // pred_region
      _
    $region29: #{critic_forward.1} parent=1 // pred_fallthru
      _
    // Predicated region
    $region30: #{critic_forward.1} parent=1 // pred_check
      _
    $region31: #{critic_forward.1} parent=1 // pred_check_branch
      %60 = sbr.rel (0) target = $region33
    $region32: #{critic_forward.1} parent=1 // pred_region
      %61 = dma.done [#allocation4], 4096
    $region33: #{critic_forward.1} parent=1 // pred_fallthru
      _
    // Predicated region
    $region34: #{critic_forward.1} parent=1 // pred_check
      _
    $region35: #{critic_forward.1} parent=1 // pred_check_branch
      %63 = sbr.rel (0) target = $region37
    $region36: #{critic_forward.1} parent=1 // pred_region
      %64 = dma.done [#allocation6], 1024
    $region37: #{critic_forward.1} parent=1 // pred_fallthru
      _
    // Predicated region
    $region38: #{critic_forward.1} parent=1 // pred_check
      _
    $region39: #{critic_forward.1} parent=1 // pred_check_branch
      %66 = sbr.rel (0) target = $region41
    $region40: #{critic_forward.1} parent=1 // pred_region
      %67 = dma.done [#allocation6], 8192
    $region41: #{critic_forward.1} parent=1 // pred_fallthru
      _
    %v69 = vld [vmem:[#allocation3] sm:$0xff]
    %v70 = vld [vmem:[#allocation3 + $0x8] sm:$0xff]
    %v71 = vld [vmem:[#allocation3 + $0x10] sm:$0xff]
    %v72 = vld [vmem:[#allocation3 + $0x18] sm:$0xff]
    %v73 = vld [vmem:[#allocation3 + $0x20] sm:$0xff]
    %v74 = vld [vmem:[#allocation3 + $0x28] sm:$0xff]
    %v75 = vld [vmem:[#allocation3 + $0x30] sm:$0xff]
    %v76 = vld [vmem:[#allocation3 + $0x38] sm:$0xff]
    %v77 = vld [vmem:[#allocation3 + $0x40] sm:$0xff]
    %v78 = vld [vmem:[#allocation3 + $0x48] sm:$0xff]
    %v79 = vld [vmem:[#allocation3 + $0x50] sm:$0xff]
    %v80 = vld [vmem:[#allocation3 + $0x58] sm:$0xff]
    %v81 = vld [vmem:[#allocation3 + $0x60] sm:$0xff]
    %v82 = vld [vmem:[#allocation3 + $0x68] sm:$0xff]
    %v83 = vld [vmem:[#allocation3 + $0x70] sm:$0xff]
    %v84 = vld [vmem:[#allocation3 + $0x78] sm:$0xff]
    %v85 = vld [vmem:[#allocation3 + $0x80] sm:$0xff]
    %v86 = vld [vmem:[#allocation3 + $0x88] sm:$0xff]
    %v87 = vld [vmem:[#allocation3 + $0x90] sm:$0xff]
    %v88 = vld [vmem:[#allocation3 + $0x98] sm:$0xff]
    %v89 = vld [vmem:[#allocation3 + $0xa0] sm:$0xff]
    %v90 = vld [vmem:[#allocation3 + $0xa8] sm:$0xff]
    %v91 = vld [vmem:[#allocation3 + $0xb0] sm:$0xff]
    %v92 = vld [vmem:[#allocation3 + $0xb8] sm:$0xff]
    %v93 = vld [vmem:[#allocation3 + $0xc0] sm:$0xff]
    %v94 = vld [vmem:[#allocation3 + $0xc8] sm:$0xff]
    %v95 = vld [vmem:[#allocation3 + $0xd0] sm:$0xff]
    %v96 = vld [vmem:[#allocation3 + $0xd8] sm:$0xff]
    %v97 = vld [vmem:[#allocation3 + $0xe0] sm:$0xff]
    %v98 = vld [vmem:[#allocation3 + $0xe8] sm:$0xff]
    %v99 = vld [vmem:[#allocation3 + $0xf0] sm:$0xff]
    %v100 = vld [vmem:[#allocation3 + $0xf8] sm:$0xff]
    %v101 = vpack.c.bf16 %v70, %v69
    %v102 = vpack.c.bf16 %v72, %v71
    %v103 = vpack.c.bf16 %v74, %v73
    %v104 = vpack.c.bf16 %v76, %v75
    %v105 = vpack.c.bf16 %v78, %v77
    %v106 = vpack.c.bf16 %v80, %v79
    %v107 = vpack.c.bf16 %v82, %v81
    %v108 = vpack.c.bf16 %v84, %v83
    %v109 = vpack.c.bf16 %v86, %v85
    %v110 = vpack.c.bf16 %v88, %v87
    %v111 = vpack.c.bf16 %v90, %v89
    %v112 = vpack.c.bf16 %v92, %v91
    %v113 = vpack.c.bf16 %v94, %v93
    %v114 = vpack.c.bf16 %v96, %v95
    %v115 = vpack.c.bf16 %v98, %v97
    %v116 = vpack.c.bf16 %v100, %v99
    %v117 = vld [vmem:[#allocation5] sm:$0xff]
    %v118 = vld [vmem:[#allocation5 + $0x8] sm:$0xff]
    %v119 = vld [vmem:[#allocation5 + $0x10] sm:$0xff]
    %v120 = vld [vmem:[#allocation5 + $0x18] sm:$0xff]
    %v121 = vld [vmem:[#allocation5 + $0x20] sm:$0xff]
    %v122 = vld [vmem:[#allocation5 + $0x28] sm:$0xff]
    %v123 = vld [vmem:[#allocation5 + $0x30] sm:$0xff]
    %v124 = vld [vmem:[#allocation5 + $0x38] sm:$0xff]
    %v125 = vld [vmem:[%s2] sm:$0xf]
    %v127 = vlaneseq
    %v128 = vshrl.u32 %v127, 7
    %v129 = vsub.s32 0, %v128
    %v130 = vrot.slane %v125, %v129
    %v131 = vlaneseq
    %v132 = vshrl.u32 %v131, 7
    %v133 = vsub.s32 1, %v132
    %v134 = vrot.slane %v125, %v133
    %v135 = vlaneseq
    %v136 = vshrl.u32 %v135, 7
    %v137 = vsub.s32 2, %v136
    %v138 = vrot.slane %v125, %v137
    %v139 = vlaneseq
    %v140 = vshrl.u32 %v139, 7
    %v141 = vsub.s32 3, %v140
    %v142 = vrot.slane %v125, %v141
    %v155 = vunpack.c.l.b16 %v117
    %v156 = vunpack.c.h.b16 %v117
    %v157 = vunpack.c.l.b16 %v118
    %v158 = vunpack.c.h.b16 %v118
    %v159 = vunpack.c.l.b16 %v119
    %v160 = vunpack.c.h.b16 %v119
    %v161 = vunpack.c.l.b16 %v120
    %v162 = vunpack.c.h.b16 %v120
    %v163 = vunpack.c.l.b16 %v121
    %v164 = vunpack.c.h.b16 %v121
    %v165 = vunpack.c.l.b16 %v122
    %v166 = vunpack.c.h.b16 %v122
    %v167 = vunpack.c.l.b16 %v123
    %v168 = vunpack.c.h.b16 %v123
    %v169 = vunpack.c.l.b16 %v124
    %v170 = vunpack.c.h.b16 %v124
    %v171 = vpack.c.b16 %v159, %v155
    %v172 = vpack.c.b16 %v160, %v156
    %v173 = vpack.c.b16 %v161, %v157
    %v174 = vpack.c.b16 %v162, %v158
    %v175 = vpack.c.b16 %v167, %v163
    %v176 = vpack.c.b16 %v168, %v164
    %v177 = vpack.c.b16 %v169, %v165
    %v178 = vpack.c.b16 %v170, %v166
    %vm187 = vcmask 261120
    %v189 = vsel %vm187, %v101, 0
    %v192 = vsel %vm187, %v102, 0
    %v195 = vsel %vm187, %v103, 0
    %v198 = vsel %vm187, %v104, 0
    %v201 = vsel %vm187, %v105, 0
    %v204 = vsel %vm187, %v106, 0
    %v207 = vsel %vm187, %v107, 0
    %v210 = vsel %vm187, %v108, 0
    %v213 = vsel %vm187, %v109, 0
    %v216 = vsel %vm187, %v110, 0
    %v219 = vsel %vm187, %v111, 0
    %v222 = vsel %vm187, %v112, 0
    %v225 = vsel %vm187, %v113, 0
    %v228 = vsel %vm187, %v114, 0
    %v231 = vsel %vm187, %v115, 0
    %v234 = vsel %vm187, %v116, 0
    %236 = vmatprep.subr.bf16.mxu0 %v172
    %237 = vmatpush1.bf16.msra.mxu0 %v171
    %238 = vmatprep.subr.bf16.mxu0 %v176
    %239 = vmatpush1.bf16.msra.mxu0 %v175
    %240 = vmatprep.subr.bf16.mxu0 0
    %241 = vmatpush1.bf16.msra.mxu0 0
    %242 = vmatprep.subr.bf16.mxu0 0
    %243 = vmatpush1.bf16.msra.mxu0 0
    %244 = vmatprep.subr.bf16.mxu0 0
    %245 = vmatpush1.bf16.msra.mxu0 0
    %246 = vmatprep.subr.bf16.mxu0 0
    %247 = vmatpush1.bf16.msra.mxu0 0
    %248 = vmatprep.subr.bf16.mxu0 0
    %249 = vmatpush1.bf16.msra.mxu0 0
    %250 = vmatprep.subr.bf16.mxu0 0
    %251 = vmatpush1.bf16.msra.mxu0 0
    %252 = vmatprep.subr.bf16.mxu0 0
    %253 = vmatpush1.bf16.msra.mxu0 0
    %254 = vmatprep.subr.bf16.mxu0 0
    %255 = vmatpush1.bf16.msra.mxu0 0
    %256 = vmatprep.subr.bf16.mxu0 0
    %257 = vmatpush1.bf16.msra.mxu0 0
    %258 = vmatprep.subr.bf16.mxu0 0
    %259 = vmatpush1.bf16.msra.mxu0 0
    %260 = vmatprep.subr.bf16.mxu0 0
    %261 = vmatpush1.bf16.msra.mxu0 0
    %262 = vmatprep.subr.bf16.mxu0 0
    %263 = vmatpush1.bf16.msra.mxu0 0
    %264 = vmatprep.subr.bf16.mxu0 0
    %265 = vmatpush1.bf16.msra.mxu0 0
    %266 = vmatprep.subr.bf16.mxu0 0
    %267 = vmatpush1.bf16.msra.mxu0 0
    %268 = vmatprep.mubr.bf16.mxu0 0
    %269 = vmatmul.mubr.bf16.gmra.mrb[0].mxu0 %v189
    %v270 = vpop.f32.mrb[0].mxu0
    %v271 = vadd.f32 %v130, %v270
    %v272 = vpop.f32.mrb[0].mxu0
    %v273 = vadd.f32 %v134, %v272
    %v274 = vpop.f32.mrb[0].mxu0
    %v275 = vadd.f32 %v130, %v274
    %v276 = vpop.f32.mrb[0].mxu0
    %v277 = vadd.f32 %v134, %v276
    %278 = vmatprep.mubr.bf16.mxu0 0
    %279 = vmatmul.mubr.bf16.gmra.mrb[0].mxu0 %v192
    %v280 = vpop.f32.mrb[0].mxu0
    %v281 = vadd.f32 %v130, %v280
    %v282 = vpop.f32.mrb[0].mxu0
    %v283 = vadd.f32 %v134, %v282
    %v284 = vpop.f32.mrb[0].mxu0
    %v285 = vadd.f32 %v130, %v284
    %v286 = vpop.f32.mrb[0].mxu0
    %v287 = vadd.f32 %v134, %v286
    %288 = vmatprep.mubr.bf16.mxu0 0
    %289 = vmatmul.mubr.bf16.gmra.mrb[0].mxu0 %v195
    %v290 = vpop.f32.mrb[0].mxu0
    %v291 = vadd.f32 %v130, %v290
    %v292 = vpop.f32.mrb[0].mxu0
    %v293 = vadd.f32 %v134, %v292
    %v294 = vpop.f32.mrb[0].mxu0
    %v295 = vadd.f32 %v130, %v294
    %v296 = vpop.f32.mrb[0].mxu0
    %v297 = vadd.f32 %v134, %v296
    %298 = vmatprep.mubr.bf16.mxu0 0
    %299 = vmatmul.mubr.bf16.gmra.mrb[0].mxu0 %v198
    %v300 = vpop.f32.mrb[0].mxu0
    %v301 = vadd.f32 %v130, %v300
    %v302 = vpop.f32.mrb[0].mxu0
    %v303 = vadd.f32 %v134, %v302
    %v304 = vpop.f32.mrb[0].mxu0
    %v305 = vadd.f32 %v130, %v304
    %v306 = vpop.f32.mrb[0].mxu0
    %v307 = vadd.f32 %v134, %v306
    %308 = vmatprep.mubr.bf16.mxu0 0
    %309 = vmatmul.mubr.bf16.gmra.mrb[0].mxu0 %v201
    %v310 = vpop.f32.mrb[0].mxu0
    %v311 = vadd.f32 %v130, %v310
    %v312 = vpop.f32.mrb[0].mxu0
    %v313 = vadd.f32 %v134, %v312
    %v314 = vpop.f32.mrb[0].mxu0
    %v315 = vadd.f32 %v130, %v314
    %v316 = vpop.f32.mrb[0].mxu0
    %v317 = vadd.f32 %v134, %v316
    %318 = vmatprep.mubr.bf16.mxu0 0
    %319 = vmatmul.mubr.bf16.gmra.mrb[0].mxu0 %v204
    %v320 = vpop.f32.mrb[0].mxu0
    %v321 = vadd.f32 %v130, %v320
    %v322 = vpop.f32.mrb[0].mxu0
    %v323 = vadd.f32 %v134, %v322
    %v324 = vpop.f32.mrb[0].mxu0
    %v325 = vadd.f32 %v130, %v324
    %v326 = vpop.f32.mrb[0].mxu0
    %v327 = vadd.f32 %v134, %v326
    %328 = vmatprep.mubr.bf16.mxu0 0
    %329 = vmatmul.mubr.bf16.gmra.mrb[0].mxu0 %v207
    %v330 = vpop.f32.mrb[0].mxu0
    %v331 = vadd.f32 %v130, %v330
    %v332 = vpop.f32.mrb[0].mxu0
    %v333 = vadd.f32 %v134, %v332
    %v334 = vpop.f32.mrb[0].mxu0
    %v335 = vadd.f32 %v130, %v334
    %v336 = vpop.f32.mrb[0].mxu0
    %v337 = vadd.f32 %v134, %v336
    %338 = vmatprep.mubr.bf16.mxu0 0
    %339 = vmatmul.mubr.bf16.gmra.mrb[0].mxu0 %v210
    %v340 = vpop.f32.mrb[0].mxu0
    %v341 = vadd.f32 %v130, %v340
    %v342 = vpop.f32.mrb[0].mxu0
    %v343 = vadd.f32 %v134, %v342
    %v344 = vpop.f32.mrb[0].mxu0
    %v345 = vadd.f32 %v130, %v344
    %v346 = vpop.f32.mrb[0].mxu0
    %v347 = vadd.f32 %v134, %v346
    %348 = vmatprep.mubr.bf16.mxu0 0
    %349 = vmatmul.mubr.bf16.gmra.mrb[0].mxu0 %v213
    %v350 = vpop.f32.mrb[0].mxu0
    %v351 = vadd.f32 %v130, %v350
    %v352 = vpop.f32.mrb[0].mxu0
    %v353 = vadd.f32 %v134, %v352
    %v354 = vpop.f32.mrb[0].mxu0
    %v355 = vadd.f32 %v130, %v354
    %v356 = vpop.f32.mrb[0].mxu0
    %v357 = vadd.f32 %v134, %v356
    %358 = vmatprep.mubr.bf16.mxu0 0
    %359 = vmatmul.mubr.bf16.gmra.mrb[0].mxu0 %v216
    %v360 = vpop.f32.mrb[0].mxu0
    %v361 = vadd.f32 %v130, %v360
    %v362 = vpop.f32.mrb[0].mxu0
    %v363 = vadd.f32 %v134, %v362
    %v364 = vpop.f32.mrb[0].mxu0
    %v365 = vadd.f32 %v130, %v364
    %v366 = vpop.f32.mrb[0].mxu0
    %v367 = vadd.f32 %v134, %v366
    %368 = vmatprep.mubr.bf16.mxu0 0
    %369 = vmatmul.mubr.bf16.gmra.mrb[0].mxu0 %v219
    %v370 = vpop.f32.mrb[0].mxu0
    %v371 = vadd.f32 %v130, %v370
    %v372 = vpop.f32.mrb[0].mxu0
    %v373 = vadd.f32 %v134, %v372
    %v374 = vpop.f32.mrb[0].mxu0
    %v375 = vadd.f32 %v130, %v374
    %v376 = vpop.f32.mrb[0].mxu0
    %v377 = vadd.f32 %v134, %v376
    %378 = vmatprep.mubr.bf16.mxu0 0
    %379 = vmatmul.mubr.bf16.gmra.mrb[0].mxu0 %v222
    %v380 = vpop.f32.mrb[0].mxu0
    %v381 = vadd.f32 %v130, %v380
    %v382 = vpop.f32.mrb[0].mxu0
    %v383 = vadd.f32 %v134, %v382
    %v384 = vpop.f32.mrb[0].mxu0
    %v385 = vadd.f32 %v130, %v384
    %v386 = vpop.f32.mrb[0].mxu0
    %v387 = vadd.f32 %v134, %v386
    %388 = vmatprep.mubr.bf16.mxu0 0
    %389 = vmatmul.mubr.bf16.gmra.mrb[0].mxu0 %v225
    %v390 = vpop.f32.mrb[0].mxu0
    %v391 = vadd.f32 %v130, %v390
    %v392 = vpop.f32.mrb[0].mxu0
    %v393 = vadd.f32 %v134, %v392
    %v394 = vpop.f32.mrb[0].mxu0
    %v395 = vadd.f32 %v130, %v394
    %v396 = vpop.f32.mrb[0].mxu0
    %v397 = vadd.f32 %v134, %v396
    %398 = vmatprep.mubr.bf16.mxu0 0
    %399 = vmatmul.mubr.bf16.gmra.mrb[0].mxu0 %v228
    %v400 = vpop.f32.mrb[0].mxu0
    %v401 = vadd.f32 %v130, %v400
    %v402 = vpop.f32.mrb[0].mxu0
    %v403 = vadd.f32 %v134, %v402
    %v404 = vpop.f32.mrb[0].mxu0
    %v405 = vadd.f32 %v130, %v404
    %v406 = vpop.f32.mrb[0].mxu0
    %v407 = vadd.f32 %v134, %v406
    %408 = vmatprep.mubr.bf16.mxu0 0
    %409 = vmatmul.mubr.bf16.gmra.mrb[0].mxu0 %v231
    %v410 = vpop.f32.mrb[0].mxu0
    %v411 = vadd.f32 %v130, %v410
    %v412 = vpop.f32.mrb[0].mxu0
    %v413 = vadd.f32 %v134, %v412
    %v414 = vpop.f32.mrb[0].mxu0
    %v415 = vadd.f32 %v130, %v414
    %v416 = vpop.f32.mrb[0].mxu0
    %v417 = vadd.f32 %v134, %v416
    %418 = vmatprep.mubr.bf16.mxu0 0
    %419 = vmatmul.mubr.bf16.gmra.mrb[0].mxu0 %v234
    %v420 = vpop.f32.mrb[0].mxu0
    %v421 = vadd.f32 %v130, %v420
    %v422 = vpop.f32.mrb[0].mxu0
    %v423 = vadd.f32 %v134, %v422
    %v424 = vpop.f32.mrb[0].mxu0
    %v425 = vadd.f32 %v130, %v424
    %v426 = vpop.f32.mrb[0].mxu0
    %v427 = vadd.f32 %v134, %v426
    %428 = vdwg.mxu0
    %429 = vmatprep.subr.bf16.mxu0 %v174
    %430 = vmatpush1.bf16.msra.mxu0 %v173
    %431 = vmatprep.subr.bf16.mxu0 %v178
    %432 = vmatpush1.bf16.msra.mxu0 %v177
    %433 = vmatprep.subr.bf16.mxu0 0
    %434 = vmatpush1.bf16.msra.mxu0 0
    %435 = vmatprep.subr.bf16.mxu0 0
    %436 = vmatpush1.bf16.msra.mxu0 0
    %437 = vmatprep.subr.bf16.mxu0 0
    %438 = vmatpush1.bf16.msra.mxu0 0
    %439 = vmatprep.subr.bf16.mxu0 0
    %440 = vmatpush1.bf16.msra.mxu0 0
    %441 = vmatprep.subr.bf16.mxu0 0
    %442 = vmatpush1.bf16.msra.mxu0 0
    %443 = vmatprep.subr.bf16.mxu0 0
    %444 = vmatpush1.bf16.msra.mxu0 0
    %445 = vmatprep.subr.bf16.mxu0 0
    %446 = vmatpush1.bf16.msra.mxu0 0
    %447 = vmatprep.subr.bf16.mxu0 0
    %448 = vmatpush1.bf16.msra.mxu0 0
    %449 = vmatprep.subr.bf16.mxu0 0
    %450 = vmatpush1.bf16.msra.mxu0 0
    %451 = vmatprep.subr.bf16.mxu0 0
    %452 = vmatpush1.bf16.msra.mxu0 0
    %453 = vmatprep.subr.bf16.mxu0 0
    %454 = vmatpush1.bf16.msra.mxu0 0
    %455 = vmatprep.subr.bf16.mxu0 0
    %456 = vmatpush1.bf16.msra.mxu0 0
    %457 = vmatprep.subr.bf16.mxu0 0
    %458 = vmatpush1.bf16.msra.mxu0 0
    %459 = vmatprep.subr.bf16.mxu0 0
    %460 = vmatpush1.bf16.msra.mxu0 0
    %461 = vmatprep.mubr.bf16.mxu0 0
    %462 = vmatmul.mubr.bf16.gmra.mrb[0].mxu0 %v189
    %v463 = vpop.f32.mrb[0].mxu0
    %v464 = vadd.f32 %v138, %v463
    %v465 = vpop.f32.mrb[0].mxu0
    %v466 = vadd.f32 %v142, %v465
    %v467 = vpop.f32.mrb[0].mxu0
    %v468 = vadd.f32 %v138, %v467
    %v469 = vpop.f32.mrb[0].mxu0
    %v470 = vadd.f32 %v142, %v469
    %471 = vmatprep.mubr.bf16.mxu0 0
    %472 = vmatmul.mubr.bf16.gmra.mrb[0].mxu0 %v192
    %v473 = vpop.f32.mrb[0].mxu0
    %v474 = vadd.f32 %v138, %v473
    %v475 = vpop.f32.mrb[0].mxu0
    %v476 = vadd.f32 %v142, %v475
    %v477 = vpop.f32.mrb[0].mxu0
    %v478 = vadd.f32 %v138, %v477
    %v479 = vpop.f32.mrb[0].mxu0
    %v480 = vadd.f32 %v142, %v479
    %481 = vmatprep.mubr.bf16.mxu0 0
    %482 = vmatmul.mubr.bf16.gmra.mrb[0].mxu0 %v195
    %v483 = vpop.f32.mrb[0].mxu0
    %v484 = vadd.f32 %v138, %v483
    %v485 = vpop.f32.mrb[0].mxu0
    %v486 = vadd.f32 %v142, %v485
    %v487 = vpop.f32.mrb[0].mxu0
    %v488 = vadd.f32 %v138, %v487
    %v489 = vpop.f32.mrb[0].mxu0
    %v490 = vadd.f32 %v142, %v489
    %491 = vmatprep.mubr.bf16.mxu0 0
    %492 = vmatmul.mubr.bf16.gmra.mrb[0].mxu0 %v198
    %v493 = vpop.f32.mrb[0].mxu0
    %v494 = vadd.f32 %v138, %v493
    %v495 = vpop.f32.mrb[0].mxu0
    %v496 = vadd.f32 %v142, %v495
    %v497 = vpop.f32.mrb[0].mxu0
    %v498 = vadd.f32 %v138, %v497
    %v499 = vpop.f32.mrb[0].mxu0
    %v500 = vadd.f32 %v142, %v499
    %501 = vmatprep.mubr.bf16.mxu0 0
    %502 = vmatmul.mubr.bf16.gmra.mrb[0].mxu0 %v201
    %v503 = vpop.f32.mrb[0].mxu0
    %v504 = vadd.f32 %v138, %v503
    %v505 = vpop.f32.mrb[0].mxu0
    %v506 = vadd.f32 %v142, %v505
    %v507 = vpop.f32.mrb[0].mxu0
    %v508 = vadd.f32 %v138, %v507
    %v509 = vpop.f32.mrb[0].mxu0
    %v510 = vadd.f32 %v142, %v509
    %511 = vmatprep.mubr.bf16.mxu0 0
    %512 = vmatmul.mubr.bf16.gmra.mrb[0].mxu0 %v204
    %v513 = vpop.f32.mrb[0].mxu0
    %v514 = vadd.f32 %v138, %v513
    %v515 = vpop.f32.mrb[0].mxu0
    %v516 = vadd.f32 %v142, %v515
    %v517 = vpop.f32.mrb[0].mxu0
    %v518 = vadd.f32 %v138, %v517
    %v519 = vpop.f32.mrb[0].mxu0
    %v520 = vadd.f32 %v142, %v519
    %521 = vmatprep.mubr.bf16.mxu0 0
    %522 = vmatmul.mubr.bf16.gmra.mrb[0].mxu0 %v207
    %v523 = vpop.f32.mrb[0].mxu0
    %v524 = vadd.f32 %v138, %v523
    %v525 = vpop.f32.mrb[0].mxu0
    %v526 = vadd.f32 %v142, %v525
    %v527 = vpop.f32.mrb[0].mxu0
    %v528 = vadd.f32 %v138, %v527
    %v529 = vpop.f32.mrb[0].mxu0
    %v530 = vadd.f32 %v142, %v529
    %531 = vmatprep.mubr.bf16.mxu0 0
    %532 = vmatmul.mubr.bf16.gmra.mrb[0].mxu0 %v210
    %v533 = vpop.f32.mrb[0].mxu0
    %v534 = vadd.f32 %v138, %v533
    %v535 = vpop.f32.mrb[0].mxu0
    %v536 = vadd.f32 %v142, %v535
    %v537 = vpop.f32.mrb[0].mxu0
    %v538 = vadd.f32 %v138, %v537
    %v539 = vpop.f32.mrb[0].mxu0
    %v540 = vadd.f32 %v142, %v539
    %541 = vmatprep.mubr.bf16.mxu0 0
    %542 = vmatmul.mubr.bf16.gmra.mrb[0].mxu0 %v213
    %v543 = vpop.f32.mrb[0].mxu0
    %v544 = vadd.f32 %v138, %v543
    %v545 = vpop.f32.mrb[0].mxu0
    %v546 = vadd.f32 %v142, %v545
    %v547 = vpop.f32.mrb[0].mxu0
    %v548 = vadd.f32 %v138, %v547
    %v549 = vpop.f32.mrb[0].mxu0
    %v550 = vadd.f32 %v142, %v549
    %551 = vmatprep.mubr.bf16.mxu0 0
    %552 = vmatmul.mubr.bf16.gmra.mrb[0].mxu0 %v216
    %v553 = vpop.f32.mrb[0].mxu0
    %v554 = vadd.f32 %v138, %v553
    %v555 = vpop.f32.mrb[0].mxu0
    %v556 = vadd.f32 %v142, %v555
    %v557 = vpop.f32.mrb[0].mxu0
    %v558 = vadd.f32 %v138, %v557
    %v559 = vpop.f32.mrb[0].mxu0
    %v560 = vadd.f32 %v142, %v559
    %561 = vmatprep.mubr.bf16.mxu0 0
    %562 = vmatmul.mubr.bf16.gmra.mrb[0].mxu0 %v219
    %v563 = vpop.f32.mrb[0].mxu0
    %v564 = vadd.f32 %v138, %v563
    %v565 = vpop.f32.mrb[0].mxu0
    %v566 = vadd.f32 %v142, %v565
    %v567 = vpop.f32.mrb[0].mxu0
    %v568 = vadd.f32 %v138, %v567
    %v569 = vpop.f32.mrb[0].mxu0
    %v570 = vadd.f32 %v142, %v569
    %571 = vmatprep.mubr.bf16.mxu0 0
    %572 = vmatmul.mubr.bf16.gmra.mrb[0].mxu0 %v222
    %v573 = vpop.f32.mrb[0].mxu0
    %v574 = vadd.f32 %v138, %v573
    %v575 = vpop.f32.mrb[0].mxu0
    %v576 = vadd.f32 %v142, %v575
    %v577 = vpop.f32.mrb[0].mxu0
    %v578 = vadd.f32 %v138, %v577
    %v579 = vpop.f32.mrb[0].mxu0
    %v580 = vadd.f32 %v142, %v579
    %581 = vmatprep.mubr.bf16.mxu0 0
    %582 = vmatmul.mubr.bf16.gmra.mrb[0].mxu0 %v225
    %v583 = vpop.f32.mrb[0].mxu0
    %v584 = vadd.f32 %v138, %v583
    %v585 = vpop.f32.mrb[0].mxu0
    %v586 = vadd.f32 %v142, %v585
    %v587 = vpop.f32.mrb[0].mxu0
    %v588 = vadd.f32 %v138, %v587
    %v589 = vpop.f32.mrb[0].mxu0
    %v590 = vadd.f32 %v142, %v589
    %591 = vmatprep.mubr.bf16.mxu0 0
    %592 = vmatmul.mubr.bf16.gmra.mrb[0].mxu0 %v228
    %v593 = vpop.f32.mrb[0].mxu0
    %v594 = vadd.f32 %v138, %v593
    %v595 = vpop.f32.mrb[0].mxu0
    %v596 = vadd.f32 %v142, %v595
    %v597 = vpop.f32.mrb[0].mxu0
    %v598 = vadd.f32 %v138, %v597
    %v599 = vpop.f32.mrb[0].mxu0
    %v600 = vadd.f32 %v142, %v599
    %601 = vmatprep.mubr.bf16.mxu0 0
    %602 = vmatmul.mubr.bf16.gmra.mrb[0].mxu0 %v231
    %v603 = vpop.f32.mrb[0].mxu0
    %v604 = vadd.f32 %v138, %v603
    %v605 = vpop.f32.mrb[0].mxu0
    %v606 = vadd.f32 %v142, %v605
    %v607 = vpop.f32.mrb[0].mxu0
    %v608 = vadd.f32 %v138, %v607
    %v609 = vpop.f32.mrb[0].mxu0
    %v610 = vadd.f32 %v142, %v609
    %611 = vmatprep.mubr.bf16.mxu0 0
    %612 = vmatmul.mubr.bf16.gmra.mrb[0].mxu0 %v234
    %v613 = vpop.f32.mrb[0].mxu0
    %v614 = vadd.f32 %v138, %v613
    %v615 = vpop.f32.mrb[0].mxu0
    %v616 = vadd.f32 %v142, %v615
    %v617 = vpop.f32.mrb[0].mxu0
    %v618 = vadd.f32 %v138, %v617
    %v619 = vpop.f32.mrb[0].mxu0
    %v620 = vadd.f32 %v142, %v619
    %621 = vdwg.mxu0
    %v622 = vmax.f32 %v271, 0.0
    %v623 = vmax.f32 %v273, 0.0
    %v624 = vmax.f32 %v464, 0.0
    %v625 = vmax.f32 %v466, 0.0
    %v626 = vmax.f32 %v275, 0.0
    %v627 = vmax.f32 %v277, 0.0
    %v628 = vmax.f32 %v468, 0.0
    %v629 = vmax.f32 %v470, 0.0
    %v630 = vmax.f32 %v281, 0.0
    %v631 = vmax.f32 %v283, 0.0
    %v632 = vmax.f32 %v474, 0.0
    %v633 = vmax.f32 %v476, 0.0
    %v634 = vmax.f32 %v285, 0.0
    %v635 = vmax.f32 %v287, 0.0
    %v636 = vmax.f32 %v478, 0.0
    %v637 = vmax.f32 %v480, 0.0
    %v638 = vmax.f32 %v291, 0.0
    %v639 = vmax.f32 %v293, 0.0
    %v640 = vmax.f32 %v484, 0.0
    %v641 = vmax.f32 %v486, 0.0
    %v642 = vmax.f32 %v295, 0.0
    %v643 = vmax.f32 %v297, 0.0
    %v644 = vmax.f32 %v488, 0.0
    %v645 = vmax.f32 %v490, 0.0
    %v646 = vmax.f32 %v301, 0.0
    %v647 = vmax.f32 %v303, 0.0
    %v648 = vmax.f32 %v494, 0.0
    %v649 = vmax.f32 %v496, 0.0
    %v650 = vmax.f32 %v305, 0.0
    %v651 = vmax.f32 %v307, 0.0
    %v652 = vmax.f32 %v498, 0.0
    %v653 = vmax.f32 %v500, 0.0
    %v654 = vmax.f32 %v311, 0.0
    %v655 = vmax.f32 %v313, 0.0
    %v656 = vmax.f32 %v504, 0.0
    %v657 = vmax.f32 %v506, 0.0
    %v658 = vmax.f32 %v315, 0.0
    %v659 = vmax.f32 %v317, 0.0
    %v660 = vmax.f32 %v508, 0.0
    %v661 = vmax.f32 %v510, 0.0
    %v662 = vmax.f32 %v321, 0.0
    %v663 = vmax.f32 %v323, 0.0
    %v664 = vmax.f32 %v514, 0.0
    %v665 = vmax.f32 %v516, 0.0
    %v666 = vmax.f32 %v325, 0.0
    %v667 = vmax.f32 %v327, 0.0
    %v668 = vmax.f32 %v518, 0.0
    %v669 = vmax.f32 %v520, 0.0
    %v670 = vmax.f32 %v331, 0.0
    %v671 = vmax.f32 %v333, 0.0
    %v672 = vmax.f32 %v524, 0.0
    %v673 = vmax.f32 %v526, 0.0
    %v674 = vmax.f32 %v335, 0.0
    %v675 = vmax.f32 %v337, 0.0
    %v676 = vmax.f32 %v528, 0.0
    %v677 = vmax.f32 %v530, 0.0
    %v678 = vmax.f32 %v341, 0.0
    %v679 = vmax.f32 %v343, 0.0
    %v680 = vmax.f32 %v534, 0.0
    %v681 = vmax.f32 %v536, 0.0
    %v682 = vmax.f32 %v345, 0.0
    %v683 = vmax.f32 %v347, 0.0
    %v684 = vmax.f32 %v538, 0.0
    %v685 = vmax.f32 %v540, 0.0
    %v686 = vmax.f32 %v351, 0.0
    %v687 = vmax.f32 %v353, 0.0
    %v688 = vmax.f32 %v544, 0.0
    %v689 = vmax.f32 %v546, 0.0
    %v690 = vmax.f32 %v355, 0.0
    %v691 = vmax.f32 %v357, 0.0
    %v692 = vmax.f32 %v548, 0.0
    %v693 = vmax.f32 %v550, 0.0
    %v694 = vmax.f32 %v361, 0.0
    %v695 = vmax.f32 %v363, 0.0
    %v696 = vmax.f32 %v554, 0.0
    %v697 = vmax.f32 %v556, 0.0
    %v698 = vmax.f32 %v365, 0.0
    %v699 = vmax.f32 %v367, 0.0
    %v700 = vmax.f32 %v558, 0.0
    %v701 = vmax.f32 %v560, 0.0
    %v702 = vmax.f32 %v371, 0.0
    %v703 = vmax.f32 %v373, 0.0
    %v704 = vmax.f32 %v564, 0.0
    %v705 = vmax.f32 %v566, 0.0
    %v706 = vmax.f32 %v375, 0.0
    %v707 = vmax.f32 %v377, 0.0
    %v708 = vmax.f32 %v568, 0.0
    %v709 = vmax.f32 %v570, 0.0
    %v710 = vmax.f32 %v381, 0.0
    %v711 = vmax.f32 %v383, 0.0
    %v712 = vmax.f32 %v574, 0.0
    %v713 = vmax.f32 %v576, 0.0
    %v714 = vmax.f32 %v385, 0.0
    %v715 = vmax.f32 %v387, 0.0
    %v716 = vmax.f32 %v578, 0.0
    %v717 = vmax.f32 %v580, 0.0
    %v718 = vmax.f32 %v391, 0.0
    %v719 = vmax.f32 %v393, 0.0
    %v720 = vmax.f32 %v584, 0.0
    %v721 = vmax.f32 %v586, 0.0
    %v722 = vmax.f32 %v395, 0.0
    %v723 = vmax.f32 %v397, 0.0
    %v724 = vmax.f32 %v588, 0.0
    %v725 = vmax.f32 %v590, 0.0
    %v726 = vmax.f32 %v401, 0.0
    %v727 = vmax.f32 %v403, 0.0
    %v728 = vmax.f32 %v594, 0.0
    %v729 = vmax.f32 %v596, 0.0
    %v730 = vmax.f32 %v405, 0.0
    %v731 = vmax.f32 %v407, 0.0
    %v732 = vmax.f32 %v598, 0.0
    %v733 = vmax.f32 %v600, 0.0
    %v734 = vmax.f32 %v411, 0.0
    %v735 = vmax.f32 %v413, 0.0
    %v736 = vmax.f32 %v604, 0.0
    %v737 = vmax.f32 %v606, 0.0
    %v738 = vmax.f32 %v415, 0.0
    %v739 = vmax.f32 %v417, 0.0
    %v740 = vmax.f32 %v608, 0.0
    %v741 = vmax.f32 %v610, 0.0
    %v742 = vmax.f32 %v421, 0.0
    %v743 = vmax.f32 %v423, 0.0
    %v744 = vmax.f32 %v614, 0.0
    %v745 = vmax.f32 %v616, 0.0
    %v746 = vmax.f32 %v425, 0.0
    %v747 = vmax.f32 %v427, 0.0
    %v748 = vmax.f32 %v618, 0.0
    %v749 = vmax.f32 %v620, 0.0
    %v750 = vpack.c.bf16 %v626, %v622
    %v751 = vpack.c.bf16 %v627, %v623
    %v752 = vpack.c.bf16 %v628, %v624
    %v753 = vpack.c.bf16 %v629, %v625
    %v754 = vpack.c.bf16 %v634, %v630
    %v755 = vpack.c.bf16 %v635, %v631
    %v756 = vpack.c.bf16 %v636, %v632
    %v757 = vpack.c.bf16 %v637, %v633
    %v758 = vpack.c.bf16 %v642, %v638
    %v759 = vpack.c.bf16 %v643, %v639
    %v760 = vpack.c.bf16 %v644, %v640
    %v761 = vpack.c.bf16 %v645, %v641
    %v762 = vpack.c.bf16 %v650, %v646
    %v763 = vpack.c.bf16 %v651, %v647
    %v764 = vpack.c.bf16 %v652, %v648
    %v765 = vpack.c.bf16 %v653, %v649
    %v766 = vpack.c.bf16 %v658, %v654
    %v767 = vpack.c.bf16 %v659, %v655
    %v768 = vpack.c.bf16 %v660, %v656
    %v769 = vpack.c.bf16 %v661, %v657
    %v770 = vpack.c.bf16 %v666, %v662
    %v771 = vpack.c.bf16 %v667, %v663
    %v772 = vpack.c.bf16 %v668, %v664
    %v773 = vpack.c.bf16 %v669, %v665
    %v774 = vpack.c.bf16 %v674, %v670
    %v775 = vpack.c.bf16 %v675, %v671
    %v776 = vpack.c.bf16 %v676, %v672
    %v777 = vpack.c.bf16 %v677, %v673
    %v778 = vpack.c.bf16 %v682, %v678
    %v779 = vpack.c.bf16 %v683, %v679
    %v780 = vpack.c.bf16 %v684, %v680
    %v781 = vpack.c.bf16 %v685, %v681
    %v782 = vpack.c.bf16 %v690, %v686
    %v783 = vpack.c.bf16 %v691, %v687
    %v784 = vpack.c.bf16 %v692, %v688
    %v785 = vpack.c.bf16 %v693, %v689
    %v786 = vpack.c.bf16 %v698, %v694
    %v787 = vpack.c.bf16 %v699, %v695
    %v788 = vpack.c.bf16 %v700, %v696
    %v789 = vpack.c.bf16 %v701, %v697
    %v790 = vpack.c.bf16 %v706, %v702
    %v791 = vpack.c.bf16 %v707, %v703
    %v792 = vpack.c.bf16 %v708, %v704
    %v793 = vpack.c.bf16 %v709, %v705
    %v794 = vpack.c.bf16 %v714, %v710
    %v795 = vpack.c.bf16 %v715, %v711
    %v796 = vpack.c.bf16 %v716, %v712
    %v797 = vpack.c.bf16 %v717, %v713
    %v798 = vpack.c.bf16 %v722, %v718
    %v799 = vpack.c.bf16 %v723, %v719
    %v800 = vpack.c.bf16 %v724, %v720
    %v801 = vpack.c.bf16 %v725, %v721
    %v802 = vpack.c.bf16 %v730, %v726
    %v803 = vpack.c.bf16 %v731, %v727
    %v804 = vpack.c.bf16 %v732, %v728
    %v805 = vpack.c.bf16 %v733, %v729
    %v806 = vpack.c.bf16 %v738, %v734
    %v807 = vpack.c.bf16 %v739, %v735
    %v808 = vpack.c.bf16 %v740, %v736
    %v809 = vpack.c.bf16 %v741, %v737
    %v810 = vpack.c.bf16 %v746, %v742
    %v811 = vpack.c.bf16 %v747, %v743
    %v812 = vpack.c.bf16 %v748, %v744
    %v813 = vpack.c.bf16 %v749, %v745
    %v814 = vld [vmem:[#allocation7] sm:$0xff]
    %v815 = vld [vmem:[#allocation7 + $0x8] sm:$0xff]
    %v816 = vld [vmem:[#allocation7 + $0x10] sm:$0xff]
    %v817 = vld [vmem:[#allocation7 + $0x18] sm:$0xff]
    %v818 = vld [vmem:[#allocation7 + $0x20] sm:$0xff]
    %v819 = vld [vmem:[#allocation7 + $0x28] sm:$0xff]
    %v820 = vld [vmem:[#allocation7 + $0x30] sm:$0xff]
    %v821 = vld [vmem:[#allocation7 + $0x38] sm:$0xff]
    %v822 = vld [vmem:[#allocation7 + $0x40] sm:$0xff]
    %v823 = vld [vmem:[#allocation7 + $0x48] sm:$0xff]
    %v824 = vld [vmem:[#allocation7 + $0x50] sm:$0xff]
    %v825 = vld [vmem:[#allocation7 + $0x58] sm:$0xff]
    %v826 = vld [vmem:[#allocation7 + $0x60] sm:$0xff]
    %v827 = vld [vmem:[#allocation7 + $0x68] sm:$0xff]
    %v828 = vld [vmem:[#allocation7 + $0x70] sm:$0xff]
    %v829 = vld [vmem:[#allocation7 + $0x78] sm:$0xff]
    %v830 = vld [vmem:[#allocation7 + $0x80] sm:$0xff]
    %v831 = vld [vmem:[#allocation7 + $0x88] sm:$0xff]
    %v832 = vld [vmem:[#allocation7 + $0x90] sm:$0xff]
    %v833 = vld [vmem:[#allocation7 + $0x98] sm:$0xff]
    %v834 = vld [vmem:[#allocation7 + $0xa0] sm:$0xff]
    %v835 = vld [vmem:[#allocation7 + $0xa8] sm:$0xff]
    %v836 = vld [vmem:[#allocation7 + $0xb0] sm:$0xff]
    %v837 = vld [vmem:[#allocation7 + $0xb8] sm:$0xff]
    %v838 = vld [vmem:[#allocation7 + $0xc0] sm:$0xff]
    %v839 = vld [vmem:[#allocation7 + $0xc8] sm:$0xff]
    %v840 = vld [vmem:[#allocation7 + $0xd0] sm:$0xff]
    %v841 = vld [vmem:[#allocation7 + $0xd8] sm:$0xff]
    %v842 = vld [vmem:[#allocation7 + $0xe0] sm:$0xff]
    %v843 = vld [vmem:[#allocation7 + $0xe8] sm:$0xff]
    %v844 = vld [vmem:[#allocation7 + $0xf0] sm:$0xff]
    %v845 = vld [vmem:[#allocation7 + $0xf8] sm:$0xff]
    %v846 = vld [vmem:[#allocation7 + $0x100] sm:$0xff]
    %v847 = vld [vmem:[#allocation7 + $0x108] sm:$0xff]
    %v848 = vld [vmem:[#allocation7 + $0x110] sm:$0xff]
    %v849 = vld [vmem:[#allocation7 + $0x118] sm:$0xff]
    %v850 = vld [vmem:[#allocation7 + $0x120] sm:$0xff]
    %v851 = vld [vmem:[#allocation7 + $0x128] sm:$0xff]
    %v852 = vld [vmem:[#allocation7 + $0x130] sm:$0xff]
    %v853 = vld [vmem:[#allocation7 + $0x138] sm:$0xff]
    %v854 = vld [vmem:[#allocation7 + $0x140] sm:$0xff]
    %v855 = vld [vmem:[#allocation7 + $0x148] sm:$0xff]
    %v856 = vld [vmem:[#allocation7 + $0x150] sm:$0xff]
    %v857 = vld [vmem:[#allocation7 + $0x158] sm:$0xff]
    %v858 = vld [vmem:[#allocation7 + $0x160] sm:$0xff]
    %v859 = vld [vmem:[#allocation7 + $0x168] sm:$0xff]
    %v860 = vld [vmem:[#allocation7 + $0x170] sm:$0xff]
    %v861 = vld [vmem:[#allocation7 + $0x178] sm:$0xff]
    %v862 = vld [vmem:[#allocation7 + $0x180] sm:$0xff]
    %v863 = vld [vmem:[#allocation7 + $0x188] sm:$0xff]
    %v864 = vld [vmem:[#allocation7 + $0x190] sm:$0xff]
    %v865 = vld [vmem:[#allocation7 + $0x198] sm:$0xff]
    %v866 = vld [vmem:[#allocation7 + $0x1a0] sm:$0xff]
    %v867 = vld [vmem:[#allocation7 + $0x1a8] sm:$0xff]
    %v868 = vld [vmem:[#allocation7 + $0x1b0] sm:$0xff]
    %v869 = vld [vmem:[#allocation7 + $0x1b8] sm:$0xff]
    %v870 = vld [vmem:[#allocation7 + $0x1c0] sm:$0xff]
    %v871 = vld [vmem:[#allocation7 + $0x1c8] sm:$0xff]
    %v872 = vld [vmem:[#allocation7 + $0x1d0] sm:$0xff]
    %v873 = vld [vmem:[#allocation7 + $0x1d8] sm:$0xff]
    %v874 = vld [vmem:[#allocation7 + $0x1e0] sm:$0xff]
    %v875 = vld [vmem:[#allocation7 + $0x1e8] sm:$0xff]
    %v876 = vld [vmem:[#allocation7 + $0x1f0] sm:$0xff]
    %v877 = vld [vmem:[#allocation7 + $0x1f8] sm:$0xff]
    %v878 = vld [vmem:[%s4] sm:$0x3]
    %v880 = vlaneseq
    %v881 = vshrl.u32 %v880, 7
    %v882 = vsub.s32 0, %v881
    %v883 = vrot.slane %v878, %v882
    %v884 = vlaneseq
    %v885 = vshrl.u32 %v884, 7
    %v886 = vsub.s32 1, %v885
    %v887 = vrot.slane %v878, %v886
    %v954 = vunpack.c.l.b16 %v814
    %v955 = vunpack.c.h.b16 %v814
    %v956 = vunpack.c.l.b16 %v815
    %v957 = vunpack.c.h.b16 %v815
    %v958 = vunpack.c.l.b16 %v816
    %v959 = vunpack.c.h.b16 %v816
    %v960 = vunpack.c.l.b16 %v817
    %v961 = vunpack.c.h.b16 %v817
    %v962 = vunpack.c.l.b16 %v818
    %v963 = vunpack.c.h.b16 %v818
    %v964 = vunpack.c.l.b16 %v819
    %v965 = vunpack.c.h.b16 %v819
    %v966 = vunpack.c.l.b16 %v820
    %v967 = vunpack.c.h.b16 %v820
    %v968 = vunpack.c.l.b16 %v821
    %v969 = vunpack.c.h.b16 %v821
    %v970 = vunpack.c.l.b16 %v822
    %v971 = vunpack.c.h.b16 %v822
    %v972 = vunpack.c.l.b16 %v823
    %v973 = vunpack.c.h.b16 %v823
    %v974 = vunpack.c.l.b16 %v824
    %v975 = vunpack.c.h.b16 %v824
    %v976 = vunpack.c.l.b16 %v825
    %v977 = vunpack.c.h.b16 %v825
    %v978 = vunpack.c.l.b16 %v826
    %v979 = vunpack.c.h.b16 %v826
    %v980 = vunpack.c.l.b16 %v827
    %v981 = vunpack.c.h.b16 %v827
    %v982 = vunpack.c.l.b16 %v828
    %v983 = vunpack.c.h.b16 %v828
    %v984 = vunpack.c.l.b16 %v829
    %v985 = vunpack.c.h.b16 %v829
    %v986 = vunpack.c.l.b16 %v830
    %v987 = vunpack.c.h.b16 %v830
    %v988 = vunpack.c.l.b16 %v831
    %v989 = vunpack.c.h.b16 %v831
    %v990 = vunpack.c.l.b16 %v832
    %v991 = vunpack.c.h.b16 %v832
    %v992 = vunpack.c.l.b16 %v833
    %v993 = vunpack.c.h.b16 %v833
    %v994 = vunpack.c.l.b16 %v834
    %v995 = vunpack.c.h.b16 %v834
    %v996 = vunpack.c.l.b16 %v835
    %v997 = vunpack.c.h.b16 %v835
    %v998 = vunpack.c.l.b16 %v836
    %v999 = vunpack.c.h.b16 %v836
    %v1000 = vunpack.c.l.b16 %v837
    %v1001 = vunpack.c.h.b16 %v837
    %v1002 = vunpack.c.l.b16 %v838
    %v1003 = vunpack.c.h.b16 %v838
    %v1004 = vunpack.c.l.b16 %v839
    %v1005 = vunpack.c.h.b16 %v839
    %v1006 = vunpack.c.l.b16 %v840
    %v1007 = vunpack.c.h.b16 %v840
    %v1008 = vunpack.c.l.b16 %v841
    %v1009 = vunpack.c.h.b16 %v841
    %v1010 = vunpack.c.l.b16 %v842
    %v1011 = vunpack.c.h.b16 %v842
    %v1012 = vunpack.c.l.b16 %v843
    %v1013 = vunpack.c.h.b16 %v843
    %v1014 = vunpack.c.l.b16 %v844
    %v1015 = vunpack.c.h.b16 %v844
    %v1016 = vunpack.c.l.b16 %v845
    %v1017 = vunpack.c.h.b16 %v845
    %v1018 = vunpack.c.l.b16 %v846
    %v1019 = vunpack.c.h.b16 %v846
    %v1020 = vunpack.c.l.b16 %v847
    %v1021 = vunpack.c.h.b16 %v847
    %v1022 = vunpack.c.l.b16 %v848
    %v1023 = vunpack.c.h.b16 %v848
    %v1024 = vunpack.c.l.b16 %v849
    %v1025 = vunpack.c.h.b16 %v849
    %v1026 = vunpack.c.l.b16 %v850
    %v1027 = vunpack.c.h.b16 %v850
    %v1028 = vunpack.c.l.b16 %v851
    %v1029 = vunpack.c.h.b16 %v851
    %v1030 = vunpack.c.l.b16 %v852
    %v1031 = vunpack.c.h.b16 %v852
    %v1032 = vunpack.c.l.b16 %v853
    %v1033 = vunpack.c.h.b16 %v853
    %v1034 = vunpack.c.l.b16 %v854
    %v1035 = vunpack.c.h.b16 %v854
    %v1036 = vunpack.c.l.b16 %v855
    %v1037 = vunpack.c.h.b16 %v855
    %v1038 = vunpack.c.l.b16 %v856
    %v1039 = vunpack.c.h.b16 %v856
    %v1040 = vunpack.c.l.b16 %v857
    %v1041 = vunpack.c.h.b16 %v857
    %v1042 = vunpack.c.l.b16 %v858
    %v1043 = vunpack.c.h.b16 %v858
    %v1044 = vunpack.c.l.b16 %v859
    %v1045 = vunpack.c.h.b16 %v859
    %v1046 = vunpack.c.l.b16 %v860
    %v1047 = vunpack.c.h.b16 %v860
    %v1048 = vunpack.c.l.b16 %v861
    %v1049 = vunpack.c.h.b16 %v861
    %v1050 = vunpack.c.l.b16 %v862
    %v1051 = vunpack.c.h.b16 %v862
    %v1052 = vunpack.c.l.b16 %v863
    %v1053 = vunpack.c.h.b16 %v863
    %v1054 = vunpack.c.l.b16 %v864
    %v1055 = vunpack.c.h.b16 %v864
    %v1056 = vunpack.c.l.b16 %v865
    %v1057 = vunpack.c.h.b16 %v865
    %v1058 = vunpack.c.l.b16 %v866
    %v1059 = vunpack.c.h.b16 %v866
    %v1060 = vunpack.c.l.b16 %v867
    %v1061 = vunpack.c.h.b16 %v867
    %v1062 = vunpack.c.l.b16 %v868
    %v1063 = vunpack.c.h.b16 %v868
    %v1064 = vunpack.c.l.b16 %v869
    %v1065 = vunpack.c.h.b16 %v869
    %v1066 = vunpack.c.l.b16 %v870
    %v1067 = vunpack.c.h.b16 %v870
    %v1068 = vunpack.c.l.b16 %v871
    %v1069 = vunpack.c.h.b16 %v871
    %v1070 = vunpack.c.l.b16 %v872
    %v1071 = vunpack.c.h.b16 %v872
    %v1072 = vunpack.c.l.b16 %v873
    %v1073 = vunpack.c.h.b16 %v873
    %v1074 = vunpack.c.l.b16 %v874
    %v1075 = vunpack.c.h.b16 %v874
    %v1076 = vunpack.c.l.b16 %v875
    %v1077 = vunpack.c.h.b16 %v875
    %v1078 = vunpack.c.l.b16 %v876
    %v1079 = vunpack.c.h.b16 %v876
    %v1080 = vunpack.c.l.b16 %v877
    %v1081 = vunpack.c.h.b16 %v877
    %v1082 = vpack.c.b16 %v956, %v954
    %v1083 = vpack.c.b16 %v957, %v955
    %v1084 = vpack.c.b16 %v960, %v958
    %v1085 = vpack.c.b16 %v961, %v959
    %v1086 = vpack.c.b16 %v964, %v962
    %v1087 = vpack.c.b16 %v965, %v963
    %v1088 = vpack.c.b16 %v968, %v966
    %v1089 = vpack.c.b16 %v969, %v967
    %v1090 = vpack.c.b16 %v972, %v970
    %v1091 = vpack.c.b16 %v973, %v971
    %v1092 = vpack.c.b16 %v976, %v974
    %v1093 = vpack.c.b16 %v977, %v975
    %v1094 = vpack.c.b16 %v980, %v978
    %v1095 = vpack.c.b16 %v981, %v979
    %v1096 = vpack.c.b16 %v984, %v982
    %v1097 = vpack.c.b16 %v985, %v983
    %v1098 = vpack.c.b16 %v988, %v986
    %v1099 = vpack.c.b16 %v989, %v987
    %v1100 = vpack.c.b16 %v992, %v990
    %v1101 = vpack.c.b16 %v993, %v991
    %v1102 = vpack.c.b16 %v996, %v994
    %v1103 = vpack.c.b16 %v997, %v995
    %v1104 = vpack.c.b16 %v1000, %v998
    %v1105 = vpack.c.b16 %v1001, %v999
    %v1106 = vpack.c.b16 %v1004, %v1002
    %v1107 = vpack.c.b16 %v1005, %v1003
    %v1108 = vpack.c.b16 %v1008, %v1006
    %v1109 = vpack.c.b16 %v1009, %v1007
    %v1110 = vpack.c.b16 %v1012, %v1010
    %v1111 = vpack.c.b16 %v1013, %v1011
    %v1112 = vpack.c.b16 %v1016, %v1014
    %v1113 = vpack.c.b16 %v1017, %v1015
    %v1114 = vpack.c.b16 %v1020, %v1018
    %v1115 = vpack.c.b16 %v1021, %v1019
    %v1116 = vpack.c.b16 %v1024, %v1022
    %v1117 = vpack.c.b16 %v1025, %v1023
    %v1118 = vpack.c.b16 %v1028, %v1026
    %v1119 = vpack.c.b16 %v1029, %v1027
    %v1120 = vpack.c.b16 %v1032, %v1030
    %v1121 = vpack.c.b16 %v1033, %v1031
    %v1122 = vpack.c.b16 %v1036, %v1034
    %v1123 = vpack.c.b16 %v1037, %v1035
    %v1124 = vpack.c.b16 %v1040, %v1038
    %v1125 = vpack.c.b16 %v1041, %v1039
    %v1126 = vpack.c.b16 %v1044, %v1042
    %v1127 = vpack.c.b16 %v1045, %v1043
    %v1128 = vpack.c.b16 %v1048, %v1046
    %v1129 = vpack.c.b16 %v1049, %v1047
    %v1130 = vpack.c.b16 %v1052, %v1050
    %v1131 = vpack.c.b16 %v1053, %v1051
    %v1132 = vpack.c.b16 %v1056, %v1054
    %v1133 = vpack.c.b16 %v1057, %v1055
    %v1134 = vpack.c.b16 %v1060, %v1058
    %v1135 = vpack.c.b16 %v1061, %v1059
    %v1136 = vpack.c.b16 %v1064, %v1062
    %v1137 = vpack.c.b16 %v1065, %v1063
    %v1138 = vpack.c.b16 %v1068, %v1066
    %v1139 = vpack.c.b16 %v1069, %v1067
    %v1140 = vpack.c.b16 %v1072, %v1070
    %v1141 = vpack.c.b16 %v1073, %v1071
    %v1142 = vpack.c.b16 %v1076, %v1074
    %v1143 = vpack.c.b16 %v1077, %v1075
    %v1144 = vpack.c.b16 %v1080, %v1078
    %v1145 = vpack.c.b16 %v1081, %v1079
    %1210 = vmatprep.subr.bf16.mxu0 %v1083
    %1211 = vmatpush1.bf16.msra.mxu0 %v1082
    %1212 = vmatprep.subr.bf16.mxu0 %v1085
    %1213 = vmatpush1.bf16.msra.mxu0 %v1084
    %1214 = vmatprep.subr.bf16.mxu0 %v1087
    %1215 = vmatpush1.bf16.msra.mxu0 %v1086
    %1216 = vmatprep.subr.bf16.mxu0 %v1089
    %1217 = vmatpush1.bf16.msra.mxu0 %v1088
    %1218 = vmatprep.subr.bf16.mxu0 %v1091
    %1219 = vmatpush1.bf16.msra.mxu0 %v1090
    %1220 = vmatprep.subr.bf16.mxu0 %v1093
    %1221 = vmatpush1.bf16.msra.mxu0 %v1092
    %1222 = vmatprep.subr.bf16.mxu0 %v1095
    %1223 = vmatpush1.bf16.msra.mxu0 %v1094
    %1224 = vmatprep.subr.bf16.mxu0 %v1097
    %1225 = vmatpush1.bf16.msra.mxu0 %v1096
    %1226 = vmatprep.subr.bf16.mxu0 %v1099
    %1227 = vmatpush1.bf16.msra.mxu0 %v1098
    %1228 = vmatprep.subr.bf16.mxu0 %v1101
    %1229 = vmatpush1.bf16.msra.mxu0 %v1100
    %1230 = vmatprep.subr.bf16.mxu0 %v1103
    %1231 = vmatpush1.bf16.msra.mxu0 %v1102
    %1232 = vmatprep.subr.bf16.mxu0 %v1105
    %1233 = vmatpush1.bf16.msra.mxu0 %v1104
    %1234 = vmatprep.subr.bf16.mxu0 %v1107
    %1235 = vmatpush1.bf16.msra.mxu0 %v1106
    %1236 = vmatprep.subr.bf16.mxu0 %v1109
    %1237 = vmatpush1.bf16.msra.mxu0 %v1108
    %1238 = vmatprep.subr.bf16.mxu0 %v1111
    %1239 = vmatpush1.bf16.msra.mxu0 %v1110
    %1240 = vmatprep.subr.bf16.mxu0 %v1113
    %1241 = vmatpush1.bf16.msra.mxu0 %v1112
    %1242 = vmatprep.mubr.bf16.mxu0 %v751
    %1243 = vmatmul.mubr.bf16.gmra.mrb[0].mxu0 %v750
    %v1244 = vpop.f32.mrb[0].mxu0
    %v1245 = vadd.f32 %v883, %v1244
    %v1246 = vpop.f32.mrb[0].mxu0
    %v1247 = vadd.f32 %v887, %v1246
    %v1248 = vpop.f32.mrb[0].mxu0
    %v1249 = vadd.f32 %v883, %v1248
    %v1250 = vpop.f32.mrb[0].mxu0
    %v1251 = vadd.f32 %v887, %v1250
    %1252 = vmatprep.mubr.bf16.mxu0 %v755
    %1253 = vmatmul.mubr.bf16.gmra.mrb[0].mxu0 %v754
    %v1254 = vpop.f32.mrb[0].mxu0
    %v1255 = vadd.f32 %v883, %v1254
    %v1256 = vpop.f32.mrb[0].mxu0
    %v1257 = vadd.f32 %v887, %v1256
    %v1258 = vpop.f32.mrb[0].mxu0
    %v1259 = vadd.f32 %v883, %v1258
    %v1260 = vpop.f32.mrb[0].mxu0
    %v1261 = vadd.f32 %v887, %v1260
    %1262 = vmatprep.mubr.bf16.mxu0 %v759
    %1263 = vmatmul.mubr.bf16.gmra.mrb[0].mxu0 %v758
    %v1264 = vpop.f32.mrb[0].mxu0
    %v1265 = vadd.f32 %v883, %v1264
    %v1266 = vpop.f32.mrb[0].mxu0
    %v1267 = vadd.f32 %v887, %v1266
    %v1268 = vpop.f32.mrb[0].mxu0
    %v1269 = vadd.f32 %v883, %v1268
    %v1270 = vpop.f32.mrb[0].mxu0
    %v1271 = vadd.f32 %v887, %v1270
    %1272 = vmatprep.mubr.bf16.mxu0 %v763
    %1273 = vmatmul.mubr.bf16.gmra.mrb[0].mxu0 %v762
    %v1274 = vpop.f32.mrb[0].mxu0
    %v1275 = vadd.f32 %v883, %v1274
    %v1276 = vpop.f32.mrb[0].mxu0
    %v1277 = vadd.f32 %v887, %v1276
    %v1278 = vpop.f32.mrb[0].mxu0
    %v1279 = vadd.f32 %v883, %v1278
    %v1280 = vpop.f32.mrb[0].mxu0
    %v1281 = vadd.f32 %v887, %v1280
    %1282 = vmatprep.mubr.bf16.mxu0 %v767
    %1283 = vmatmul.mubr.bf16.gmra.mrb[0].mxu0 %v766
    %v1284 = vpop.f32.mrb[0].mxu0
    %v1285 = vadd.f32 %v883, %v1284
    %v1286 = vpop.f32.mrb[0].mxu0
    %v1287 = vadd.f32 %v887, %v1286
    %v1288 = vpop.f32.mrb[0].mxu0
    %v1289 = vadd.f32 %v883, %v1288
    %v1290 = vpop.f32.mrb[0].mxu0
    %v1291 = vadd.f32 %v887, %v1290
    %1292 = vmatprep.mubr.bf16.mxu0 %v771
    %1293 = vmatmul.mubr.bf16.gmra.mrb[0].mxu0 %v770
    %v1294 = vpop.f32.mrb[0].mxu0
    %v1295 = vadd.f32 %v883, %v1294
    %v1296 = vpop.f32.mrb[0].mxu0
    %v1297 = vadd.f32 %v887, %v1296
    %v1298 = vpop.f32.mrb[0].mxu0
    %v1299 = vadd.f32 %v883, %v1298
    %v1300 = vpop.f32.mrb[0].mxu0
    %v1301 = vadd.f32 %v887, %v1300
    %1302 = vmatprep.mubr.bf16.mxu0 %v775
    %1303 = vmatmul.mubr.bf16.gmra.mrb[0].mxu0 %v774
    %v1304 = vpop.f32.mrb[0].mxu0
    %v1305 = vadd.f32 %v883, %v1304
    %v1306 = vpop.f32.mrb[0].mxu0
    %v1307 = vadd.f32 %v887, %v1306
    %v1308 = vpop.f32.mrb[0].mxu0
    %v1309 = vadd.f32 %v883, %v1308
    %v1310 = vpop.f32.mrb[0].mxu0
    %v1311 = vadd.f32 %v887, %v1310
    %1312 = vmatprep.mubr.bf16.mxu0 %v779
    %1313 = vmatmul.mubr.bf16.gmra.mrb[0].mxu0 %v778
    %v1314 = vpop.f32.mrb[0].mxu0
    %v1315 = vadd.f32 %v883, %v1314
    %v1316 = vpop.f32.mrb[0].mxu0
    %v1317 = vadd.f32 %v887, %v1316
    %v1318 = vpop.f32.mrb[0].mxu0
    %v1319 = vadd.f32 %v883, %v1318
    %v1320 = vpop.f32.mrb[0].mxu0
    %v1321 = vadd.f32 %v887, %v1320
    %1322 = vmatprep.mubr.bf16.mxu0 %v783
    %1323 = vmatmul.mubr.bf16.gmra.mrb[0].mxu0 %v782
    %v1324 = vpop.f32.mrb[0].mxu0
    %v1325 = vadd.f32 %v883, %v1324
    %v1326 = vpop.f32.mrb[0].mxu0
    %v1327 = vadd.f32 %v887, %v1326
    %v1328 = vpop.f32.mrb[0].mxu0
    %v1329 = vadd.f32 %v883, %v1328
    %v1330 = vpop.f32.mrb[0].mxu0
    %v1331 = vadd.f32 %v887, %v1330
    %1332 = vmatprep.mubr.bf16.mxu0 %v787
    %1333 = vmatmul.mubr.bf16.gmra.mrb[0].mxu0 %v786
    %v1334 = vpop.f32.mrb[0].mxu0
    %v1335 = vadd.f32 %v883, %v1334
    %v1336 = vpop.f32.mrb[0].mxu0
    %v1337 = vadd.f32 %v887, %v1336
    %v1338 = vpop.f32.mrb[0].mxu0
    %v1339 = vadd.f32 %v883, %v1338
    %v1340 = vpop.f32.mrb[0].mxu0
    %v1341 = vadd.f32 %v887, %v1340
    %1342 = vmatprep.mubr.bf16.mxu0 %v791
    %1343 = vmatmul.mubr.bf16.gmra.mrb[0].mxu0 %v790
    %v1344 = vpop.f32.mrb[0].mxu0
    %v1345 = vadd.f32 %v883, %v1344
    %v1346 = vpop.f32.mrb[0].mxu0
    %v1347 = vadd.f32 %v887, %v1346
    %v1348 = vpop.f32.mrb[0].mxu0
    %v1349 = vadd.f32 %v883, %v1348
    %v1350 = vpop.f32.mrb[0].mxu0
    %v1351 = vadd.f32 %v887, %v1350
    %1352 = vmatprep.mubr.bf16.mxu0 %v795
    %1353 = vmatmul.mubr.bf16.gmra.mrb[0].mxu0 %v794
    %v1354 = vpop.f32.mrb[0].mxu0
    %v1355 = vadd.f32 %v883, %v1354
    %v1356 = vpop.f32.mrb[0].mxu0
    %v1357 = vadd.f32 %v887, %v1356
    %v1358 = vpop.f32.mrb[0].mxu0
    %v1359 = vadd.f32 %v883, %v1358
    %v1360 = vpop.f32.mrb[0].mxu0
    %v1361 = vadd.f32 %v887, %v1360
    %1362 = vmatprep.mubr.bf16.mxu0 %v799
    %1363 = vmatmul.mubr.bf16.gmra.mrb[0].mxu0 %v798
    %v1364 = vpop.f32.mrb[0].mxu0
    %v1365 = vadd.f32 %v883, %v1364
    %v1366 = vpop.f32.mrb[0].mxu0
    %v1367 = vadd.f32 %v887, %v1366
    %v1368 = vpop.f32.mrb[0].mxu0
    %v1369 = vadd.f32 %v883, %v1368
    %v1370 = vpop.f32.mrb[0].mxu0
    %v1371 = vadd.f32 %v887, %v1370
    %1372 = vmatprep.mubr.bf16.mxu0 %v803
    %1373 = vmatmul.mubr.bf16.gmra.mrb[0].mxu0 %v802
    %v1374 = vpop.f32.mrb[0].mxu0
    %v1375 = vadd.f32 %v883, %v1374
    %v1376 = vpop.f32.mrb[0].mxu0
    %v1377 = vadd.f32 %v887, %v1376
    %v1378 = vpop.f32.mrb[0].mxu0
    %v1379 = vadd.f32 %v883, %v1378
    %v1380 = vpop.f32.mrb[0].mxu0
    %v1381 = vadd.f32 %v887, %v1380
    %1382 = vmatprep.mubr.bf16.mxu0 %v807
    %1383 = vmatmul.mubr.bf16.gmra.mrb[0].mxu0 %v806
    %v1384 = vpop.f32.mrb[0].mxu0
    %v1385 = vadd.f32 %v883, %v1384
    %v1386 = vpop.f32.mrb[0].mxu0
    %v1387 = vadd.f32 %v887, %v1386
    %v1388 = vpop.f32.mrb[0].mxu0
    %v1389 = vadd.f32 %v883, %v1388
    %v1390 = vpop.f32.mrb[0].mxu0
    %v1391 = vadd.f32 %v887, %v1390
    %1392 = vmatprep.mubr.bf16.mxu0 %v811
    %1393 = vmatmul.mubr.bf16.gmra.mrb[0].mxu0 %v810
    %v1394 = vpop.f32.mrb[0].mxu0
    %v1395 = vadd.f32 %v883, %v1394
    %v1396 = vpop.f32.mrb[0].mxu0
    %v1397 = vadd.f32 %v887, %v1396
    %v1398 = vpop.f32.mrb[0].mxu0
    %v1399 = vadd.f32 %v883, %v1398
    %v1400 = vpop.f32.mrb[0].mxu0
    %v1401 = vadd.f32 %v887, %v1400
    %1402 = vdwg.mxu0
    %1403 = vmatprep.subr.bf16.mxu0 %v1115
    %1404 = vmatpush1.bf16.msra.mxu0 %v1114
    %1405 = vmatprep.subr.bf16.mxu0 %v1117
    %1406 = vmatpush1.bf16.msra.mxu0 %v1116
    %1407 = vmatprep.subr.bf16.mxu0 %v1119
    %1408 = vmatpush1.bf16.msra.mxu0 %v1118
    %1409 = vmatprep.subr.bf16.mxu0 %v1121
    %1410 = vmatpush1.bf16.msra.mxu0 %v1120
    %1411 = vmatprep.subr.bf16.mxu0 %v1123
    %1412 = vmatpush1.bf16.msra.mxu0 %v1122
    %1413 = vmatprep.subr.bf16.mxu0 %v1125
    %1414 = vmatpush1.bf16.msra.mxu0 %v1124
    %1415 = vmatprep.subr.bf16.mxu0 %v1127
    %1416 = vmatpush1.bf16.msra.mxu0 %v1126
    %1417 = vmatprep.subr.bf16.mxu0 %v1129
    %1418 = vmatpush1.bf16.msra.mxu0 %v1128
    %1419 = vmatprep.subr.bf16.mxu0 %v1131
    %1420 = vmatpush1.bf16.msra.mxu0 %v1130
    %1421 = vmatprep.subr.bf16.mxu0 %v1133
    %1422 = vmatpush1.bf16.msra.mxu0 %v1132
    %1423 = vmatprep.subr.bf16.mxu0 %v1135
    %1424 = vmatpush1.bf16.msra.mxu0 %v1134
    %1425 = vmatprep.subr.bf16.mxu0 %v1137
    %1426 = vmatpush1.bf16.msra.mxu0 %v1136
    %1427 = vmatprep.subr.bf16.mxu0 %v1139
    %1428 = vmatpush1.bf16.msra.mxu0 %v1138
    %1429 = vmatprep.subr.bf16.mxu0 %v1141
    %1430 = vmatpush1.bf16.msra.mxu0 %v1140
    %1431 = vmatprep.subr.bf16.mxu0 %v1143
    %1432 = vmatpush1.bf16.msra.mxu0 %v1142
    %1433 = vmatprep.subr.bf16.mxu0 %v1145
    %1434 = vmatpush1.bf16.msra.mxu0 %v1144
    %1435 = vmatprep.mubr.bf16.mxu0 %v753
    %1436 = vmatmul.mubr.bf16.gmra.mrb[0].mxu0 %v752
    %v1437 = vpop.f32.mrb[0].mxu0
    %v1438 = vadd.f32 %v1245, %v1437
    %v1439 = vpop.f32.mrb[0].mxu0
    %v1440 = vadd.f32 %v1247, %v1439
    %v1441 = vpop.f32.mrb[0].mxu0
    %v1442 = vadd.f32 %v1249, %v1441
    %v1443 = vpop.f32.mrb[0].mxu0
    %v1444 = vadd.f32 %v1251, %v1443
    %1445 = vmatprep.mubr.bf16.mxu0 %v757
    %1446 = vmatmul.mubr.bf16.gmra.mrb[0].mxu0 %v756
    %v1447 = vpop.f32.mrb[0].mxu0
    %v1448 = vadd.f32 %v1255, %v1447
    %v1449 = vpop.f32.mrb[0].mxu0
    %v1450 = vadd.f32 %v1257, %v1449
    %v1451 = vpop.f32.mrb[0].mxu0
    %v1452 = vadd.f32 %v1259, %v1451
    %v1453 = vpop.f32.mrb[0].mxu0
    %v1454 = vadd.f32 %v1261, %v1453
    %1455 = vmatprep.mubr.bf16.mxu0 %v761
    %1456 = vmatmul.mubr.bf16.gmra.mrb[0].mxu0 %v760
    %v1457 = vpop.f32.mrb[0].mxu0
    %v1458 = vadd.f32 %v1265, %v1457
    %v1459 = vpop.f32.mrb[0].mxu0
    %v1460 = vadd.f32 %v1267, %v1459
    %v1461 = vpop.f32.mrb[0].mxu0
    %v1462 = vadd.f32 %v1269, %v1461
    %v1463 = vpop.f32.mrb[0].mxu0
    %v1464 = vadd.f32 %v1271, %v1463
    %1465 = vmatprep.mubr.bf16.mxu0 %v765
    %1466 = vmatmul.mubr.bf16.gmra.mrb[0].mxu0 %v764
    %v1467 = vpop.f32.mrb[0].mxu0
    %v1468 = vadd.f32 %v1275, %v1467
    %v1469 = vpop.f32.mrb[0].mxu0
    %v1470 = vadd.f32 %v1277, %v1469
    %v1471 = vpop.f32.mrb[0].mxu0
    %v1472 = vadd.f32 %v1279, %v1471
    %v1473 = vpop.f32.mrb[0].mxu0
    %v1474 = vadd.f32 %v1281, %v1473
    %1475 = vmatprep.mubr.bf16.mxu0 %v769
    %1476 = vmatmul.mubr.bf16.gmra.mrb[0].mxu0 %v768
    %v1477 = vpop.f32.mrb[0].mxu0
    %v1478 = vadd.f32 %v1285, %v1477
    %v1479 = vpop.f32.mrb[0].mxu0
    %v1480 = vadd.f32 %v1287, %v1479
    %v1481 = vpop.f32.mrb[0].mxu0
    %v1482 = vadd.f32 %v1289, %v1481
    %v1483 = vpop.f32.mrb[0].mxu0
    %v1484 = vadd.f32 %v1291, %v1483
    %1485 = vmatprep.mubr.bf16.mxu0 %v773
    %1486 = vmatmul.mubr.bf16.gmra.mrb[0].mxu0 %v772
    %v1487 = vpop.f32.mrb[0].mxu0
    %v1488 = vadd.f32 %v1295, %v1487
    %v1489 = vpop.f32.mrb[0].mxu0
    %v1490 = vadd.f32 %v1297, %v1489
    %v1491 = vpop.f32.mrb[0].mxu0
    %v1492 = vadd.f32 %v1299, %v1491
    %v1493 = vpop.f32.mrb[0].mxu0
    %v1494 = vadd.f32 %v1301, %v1493
    %1495 = vmatprep.mubr.bf16.mxu0 %v777
    %1496 = vmatmul.mubr.bf16.gmra.mrb[0].mxu0 %v776
    %v1497 = vpop.f32.mrb[0].mxu0
    %v1498 = vadd.f32 %v1305, %v1497
    %v1499 = vpop.f32.mrb[0].mxu0
    %v1500 = vadd.f32 %v1307, %v1499
    %v1501 = vpop.f32.mrb[0].mxu0
    %v1502 = vadd.f32 %v1309, %v1501
    %v1503 = vpop.f32.mrb[0].mxu0
    %v1504 = vadd.f32 %v1311, %v1503
    %1505 = vmatprep.mubr.bf16.mxu0 %v781
    %1506 = vmatmul.mubr.bf16.gmra.mrb[0].mxu0 %v780
    %v1507 = vpop.f32.mrb[0].mxu0
    %v1508 = vadd.f32 %v1315, %v1507
    %v1509 = vpop.f32.mrb[0].mxu0
    %v1510 = vadd.f32 %v1317, %v1509
    %v1511 = vpop.f32.mrb[0].mxu0
    %v1512 = vadd.f32 %v1319, %v1511
    %v1513 = vpop.f32.mrb[0].mxu0
    %v1514 = vadd.f32 %v1321, %v1513
    %1515 = vmatprep.mubr.bf16.mxu0 %v785
    %1516 = vmatmul.mubr.bf16.gmra.mrb[0].mxu0 %v784
    %v1517 = vpop.f32.mrb[0].mxu0
    %v1518 = vadd.f32 %v1325, %v1517
    %v1519 = vpop.f32.mrb[0].mxu0
    %v1520 = vadd.f32 %v1327, %v1519
    %v1521 = vpop.f32.mrb[0].mxu0
    %v1522 = vadd.f32 %v1329, %v1521
    %v1523 = vpop.f32.mrb[0].mxu0
    %v1524 = vadd.f32 %v1331, %v1523
    %1525 = vmatprep.mubr.bf16.mxu0 %v789
    %1526 = vmatmul.mubr.bf16.gmra.mrb[0].mxu0 %v788
    %v1527 = vpop.f32.mrb[0].mxu0
    %v1528 = vadd.f32 %v1335, %v1527
    %v1529 = vpop.f32.mrb[0].mxu0
    %v1530 = vadd.f32 %v1337, %v1529
    %v1531 = vpop.f32.mrb[0].mxu0
    %v1532 = vadd.f32 %v1339, %v1531
    %v1533 = vpop.f32.mrb[0].mxu0
    %v1534 = vadd.f32 %v1341, %v1533
    %1535 = vmatprep.mubr.bf16.mxu0 %v793
    %1536 = vmatmul.mubr.bf16.gmra.mrb[0].mxu0 %v792
    %v1537 = vpop.f32.mrb[0].mxu0
    %v1538 = vadd.f32 %v1345, %v1537
    %v1539 = vpop.f32.mrb[0].mxu0
    %v1540 = vadd.f32 %v1347, %v1539
    %v1541 = vpop.f32.mrb[0].mxu0
    %v1542 = vadd.f32 %v1349, %v1541
    %v1543 = vpop.f32.mrb[0].mxu0
    %v1544 = vadd.f32 %v1351, %v1543
    %1545 = vmatprep.mubr.bf16.mxu0 %v797
    %1546 = vmatmul.mubr.bf16.gmra.mrb[0].mxu0 %v796
    %v1547 = vpop.f32.mrb[0].mxu0
    %v1548 = vadd.f32 %v1355, %v1547
    %v1549 = vpop.f32.mrb[0].mxu0
    %v1550 = vadd.f32 %v1357, %v1549
    %v1551 = vpop.f32.mrb[0].mxu0
    %v1552 = vadd.f32 %v1359, %v1551
    %v1553 = vpop.f32.mrb[0].mxu0
    %v1554 = vadd.f32 %v1361, %v1553
    %1555 = vmatprep.mubr.bf16.mxu0 %v801
    %1556 = vmatmul.mubr.bf16.gmra.mrb[0].mxu0 %v800
    %v1557 = vpop.f32.mrb[0].mxu0
    %v1558 = vadd.f32 %v1365, %v1557
    %v1559 = vpop.f32.mrb[0].mxu0
    %v1560 = vadd.f32 %v1367, %v1559
    %v1561 = vpop.f32.mrb[0].mxu0
    %v1562 = vadd.f32 %v1369, %v1561
    %v1563 = vpop.f32.mrb[0].mxu0
    %v1564 = vadd.f32 %v1371, %v1563
    %1565 = vmatprep.mubr.bf16.mxu0 %v805
    %1566 = vmatmul.mubr.bf16.gmra.mrb[0].mxu0 %v804
    %v1567 = vpop.f32.mrb[0].mxu0
    %v1568 = vadd.f32 %v1375, %v1567
    %v1569 = vpop.f32.mrb[0].mxu0
    %v1570 = vadd.f32 %v1377, %v1569
    %v1571 = vpop.f32.mrb[0].mxu0
    %v1572 = vadd.f32 %v1379, %v1571
    %v1573 = vpop.f32.mrb[0].mxu0
    %v1574 = vadd.f32 %v1381, %v1573
    %1575 = vmatprep.mubr.bf16.mxu0 %v809
    %1576 = vmatmul.mubr.bf16.gmra.mrb[0].mxu0 %v808
    %v1577 = vpop.f32.mrb[0].mxu0
    %v1578 = vadd.f32 %v1385, %v1577
    %v1579 = vpop.f32.mrb[0].mxu0
    %v1580 = vadd.f32 %v1387, %v1579
    %v1581 = vpop.f32.mrb[0].mxu0
    %v1582 = vadd.f32 %v1389, %v1581
    %v1583 = vpop.f32.mrb[0].mxu0
    %v1584 = vadd.f32 %v1391, %v1583
    %1585 = vmatprep.mubr.bf16.mxu0 %v813
    %1586 = vmatmul.mubr.bf16.gmra.mrb[0].mxu0 %v812
    %v1587 = vpop.f32.mrb[0].mxu0
    %v1588 = vadd.f32 %v1395, %v1587
    %v1589 = vpop.f32.mrb[0].mxu0
    %v1590 = vadd.f32 %v1397, %v1589
    %v1591 = vpop.f32.mrb[0].mxu0
    %v1592 = vadd.f32 %v1399, %v1591
    %v1593 = vpop.f32.mrb[0].mxu0
    %v1594 = vadd.f32 %v1401, %v1593
    %1595 = vdwg.mxu0
    %v1596 = vmax.f32 %v1438, 0.0
    %v1597 = vmax.f32 %v1440, 0.0
    %v1598 = vmax.f32 %v1442, 0.0
    %v1599 = vmax.f32 %v1444, 0.0
    %v1600 = vmax.f32 %v1448, 0.0
    %v1601 = vmax.f32 %v1450, 0.0
    %v1602 = vmax.f32 %v1452, 0.0
    %v1603 = vmax.f32 %v1454, 0.0
    %v1604 = vmax.f32 %v1458, 0.0
    %v1605 = vmax.f32 %v1460, 0.0
    %v1606 = vmax.f32 %v1462, 0.0
    %v1607 = vmax.f32 %v1464, 0.0
    %v1608 = vmax.f32 %v1468, 0.0
    %v1609 = vmax.f32 %v1470, 0.0
    %v1610 = vmax.f32 %v1472, 0.0
    %v1611 = vmax.f32 %v1474, 0.0
    %v1612 = vmax.f32 %v1478, 0.0
    %v1613 = vmax.f32 %v1480, 0.0
    %v1614 = vmax.f32 %v1482, 0.0
    %v1615 = vmax.f32 %v1484, 0.0
    %v1616 = vmax.f32 %v1488, 0.0
    %v1617 = vmax.f32 %v1490, 0.0
    %v1618 = vmax.f32 %v1492, 0.0
    %v1619 = vmax.f32 %v1494, 0.0
    %v1620 = vmax.f32 %v1498, 0.0
    %v1621 = vmax.f32 %v1500, 0.0
    %v1622 = vmax.f32 %v1502, 0.0
    %v1623 = vmax.f32 %v1504, 0.0
    %v1624 = vmax.f32 %v1508, 0.0
    %v1625 = vmax.f32 %v1510, 0.0
    %v1626 = vmax.f32 %v1512, 0.0
    %v1627 = vmax.f32 %v1514, 0.0
    %v1628 = vmax.f32 %v1518, 0.0
    %v1629 = vmax.f32 %v1520, 0.0
    %v1630 = vmax.f32 %v1522, 0.0
    %v1631 = vmax.f32 %v1524, 0.0
    %v1632 = vmax.f32 %v1528, 0.0
    %v1633 = vmax.f32 %v1530, 0.0
    %v1634 = vmax.f32 %v1532, 0.0
    %v1635 = vmax.f32 %v1534, 0.0
    %v1636 = vmax.f32 %v1538, 0.0
    %v1637 = vmax.f32 %v1540, 0.0
    %v1638 = vmax.f32 %v1542, 0.0
    %v1639 = vmax.f32 %v1544, 0.0
    %v1640 = vmax.f32 %v1548, 0.0
    %v1641 = vmax.f32 %v1550, 0.0
    %v1642 = vmax.f32 %v1552, 0.0
    %v1643 = vmax.f32 %v1554, 0.0
    %v1644 = vmax.f32 %v1558, 0.0
    %v1645 = vmax.f32 %v1560, 0.0
    %v1646 = vmax.f32 %v1562, 0.0
    %v1647 = vmax.f32 %v1564, 0.0
    %v1648 = vmax.f32 %v1568, 0.0
    %v1649 = vmax.f32 %v1570, 0.0
    %v1650 = vmax.f32 %v1572, 0.0
    %v1651 = vmax.f32 %v1574, 0.0
    %v1652 = vmax.f32 %v1578, 0.0
    %v1653 = vmax.f32 %v1580, 0.0
    %v1654 = vmax.f32 %v1582, 0.0
    %v1655 = vmax.f32 %v1584, 0.0
    %v1656 = vmax.f32 %v1588, 0.0
    %v1657 = vmax.f32 %v1590, 0.0
    %v1658 = vmax.f32 %v1592, 0.0
    %v1659 = vmax.f32 %v1594, 0.0
    %v1660 = vld [vmem:[%s5] sm:$0x3]
    %v1662 = vlaneseq
    %v1663 = vshrl.u32 %v1662, 7
    %v1664 = vsub.s32 0, %v1663
    %v1665 = vrot.slane %v1660, %v1664
    %v1666 = vlaneseq
    %v1667 = vshrl.u32 %v1666, 7
    %v1668 = vsub.s32 1, %v1667
    %v1669 = vrot.slane %v1660, %v1668
    %v1672 = vmul.f32 %v1596, %v1665
    %v1673 = vmul.f32 %v1597, %v1669
    %v1674 = vmul.f32 %v1598, %v1665
    %v1675 = vmul.f32 %v1599, %v1669
    %v1676 = vmul.f32 %v1600, %v1665
    %v1677 = vmul.f32 %v1601, %v1669
    %v1678 = vmul.f32 %v1602, %v1665
    %v1679 = vmul.f32 %v1603, %v1669
    %v1680 = vmul.f32 %v1604, %v1665
    %v1681 = vmul.f32 %v1605, %v1669
    %v1682 = vmul.f32 %v1606, %v1665
    %v1683 = vmul.f32 %v1607, %v1669
    %v1684 = vmul.f32 %v1608, %v1665
    %v1685 = vmul.f32 %v1609, %v1669
    %v1686 = vmul.f32 %v1610, %v1665
    %v1687 = vmul.f32 %v1611, %v1669
    %v1688 = vmul.f32 %v1612, %v1665
    %v1689 = vmul.f32 %v1613, %v1669
    %v1690 = vmul.f32 %v1614, %v1665
    %v1691 = vmul.f32 %v1615, %v1669
    %v1692 = vmul.f32 %v1616, %v1665
    %v1693 = vmul.f32 %v1617, %v1669
    %v1694 = vmul.f32 %v1618, %v1665
    %v1695 = vmul.f32 %v1619, %v1669
    %v1696 = vmul.f32 %v1620, %v1665
    %v1697 = vmul.f32 %v1621, %v1669
    %v1698 = vmul.f32 %v1622, %v1665
    %v1699 = vmul.f32 %v1623, %v1669
    %v1700 = vmul.f32 %v1624, %v1665
    %v1701 = vmul.f32 %v1625, %v1669
    %v1702 = vmul.f32 %v1626, %v1665
    %v1703 = vmul.f32 %v1627, %v1669
    %v1704 = vmul.f32 %v1628, %v1665
    %v1705 = vmul.f32 %v1629, %v1669
    %v1706 = vmul.f32 %v1630, %v1665
    %v1707 = vmul.f32 %v1631, %v1669
    %v1708 = vmul.f32 %v1632, %v1665
    %v1709 = vmul.f32 %v1633, %v1669
    %v1710 = vmul.f32 %v1634, %v1665
    %v1711 = vmul.f32 %v1635, %v1669
    %v1712 = vmul.f32 %v1636, %v1665
    %v1713 = vmul.f32 %v1637, %v1669
    %v1714 = vmul.f32 %v1638, %v1665
    %v1715 = vmul.f32 %v1639, %v1669
    %v1716 = vmul.f32 %v1640, %v1665
    %v1717 = vmul.f32 %v1641, %v1669
    %v1718 = vmul.f32 %v1642, %v1665
    %v1719 = vmul.f32 %v1643, %v1669
    %v1720 = vmul.f32 %v1644, %v1665
    %v1721 = vmul.f32 %v1645, %v1669
    %v1722 = vmul.f32 %v1646, %v1665
    %v1723 = vmul.f32 %v1647, %v1669
    %v1724 = vmul.f32 %v1648, %v1665
    %v1725 = vmul.f32 %v1649, %v1669
    %v1726 = vmul.f32 %v1650, %v1665
    %v1727 = vmul.f32 %v1651, %v1669
    %v1728 = vmul.f32 %v1652, %v1665
    %v1729 = vmul.f32 %v1653, %v1669
    %v1730 = vmul.f32 %v1654, %v1665
    %v1731 = vmul.f32 %v1655, %v1669
    %v1732 = vmul.f32 %v1656, %v1665
    %v1733 = vmul.f32 %v1657, %v1669
    %v1734 = vmul.f32 %v1658, %v1665
    %v1735 = vmul.f32 %v1659, %v1669
    %v1736 = vadd.f32 %v1672, %v1673
    %1737 = vadd.xlane.f32.xlu0 %v1736
    %v1738 = vpop.xlane.xlu0 %1737
    %v1739 = vadd.f32 %v1674, %v1675
    %1740 = vadd.xlane.f32.xlu0 %v1739
    %v1741 = vpop.xlane.xlu0 %1740
    %v1742 = vadd.f32 %v1676, %v1677
    %1743 = vadd.xlane.f32.xlu0 %v1742
    %v1744 = vpop.xlane.xlu0 %1743
    %v1745 = vadd.f32 %v1678, %v1679
    %1746 = vadd.xlane.f32.xlu0 %v1745
    %v1747 = vpop.xlane.xlu0 %1746
    %v1748 = vadd.f32 %v1680, %v1681
    %1749 = vadd.xlane.f32.xlu0 %v1748
    %v1750 = vpop.xlane.xlu0 %1749
    %v1751 = vadd.f32 %v1682, %v1683
    %1752 = vadd.xlane.f32.xlu0 %v1751
    %v1753 = vpop.xlane.xlu0 %1752
    %v1754 = vadd.f32 %v1684, %v1685
    %1755 = vadd.xlane.f32.xlu0 %v1754
    %v1756 = vpop.xlane.xlu0 %1755
    %v1757 = vadd.f32 %v1686, %v1687
    %1758 = vadd.xlane.f32.xlu0 %v1757
    %v1759 = vpop.xlane.xlu0 %1758
    %v1760 = vadd.f32 %v1688, %v1689
    %1761 = vadd.xlane.f32.xlu0 %v1760
    %v1762 = vpop.xlane.xlu0 %1761
    %v1763 = vadd.f32 %v1690, %v1691
    %1764 = vadd.xlane.f32.xlu0 %v1763
    %v1765 = vpop.xlane.xlu0 %1764
    %v1766 = vadd.f32 %v1692, %v1693
    %1767 = vadd.xlane.f32.xlu0 %v1766
    %v1768 = vpop.xlane.xlu0 %1767
    %v1769 = vadd.f32 %v1694, %v1695
    %1770 = vadd.xlane.f32.xlu0 %v1769
    %v1771 = vpop.xlane.xlu0 %1770
    %v1772 = vadd.f32 %v1696, %v1697
    %1773 = vadd.xlane.f32.xlu0 %v1772
    %v1774 = vpop.xlane.xlu0 %1773
    %v1775 = vadd.f32 %v1698, %v1699
    %1776 = vadd.xlane.f32.xlu0 %v1775
    %v1777 = vpop.xlane.xlu0 %1776
    %v1778 = vadd.f32 %v1700, %v1701
    %1779 = vadd.xlane.f32.xlu0 %v1778
    %v1780 = vpop.xlane.xlu0 %1779
    %v1781 = vadd.f32 %v1702, %v1703
    %1782 = vadd.xlane.f32.xlu0 %v1781
    %v1783 = vpop.xlane.xlu0 %1782
    %v1784 = vadd.f32 %v1704, %v1705
    %1785 = vadd.xlane.f32.xlu0 %v1784
    %v1786 = vpop.xlane.xlu0 %1785
    %v1787 = vadd.f32 %v1706, %v1707
    %1788 = vadd.xlane.f32.xlu0 %v1787
    %v1789 = vpop.xlane.xlu0 %1788
    %v1790 = vadd.f32 %v1708, %v1709
    %1791 = vadd.xlane.f32.xlu0 %v1790
    %v1792 = vpop.xlane.xlu0 %1791
    %v1793 = vadd.f32 %v1710, %v1711
    %1794 = vadd.xlane.f32.xlu0 %v1793
    %v1795 = vpop.xlane.xlu0 %1794
    %v1796 = vadd.f32 %v1712, %v1713
    %1797 = vadd.xlane.f32.xlu0 %v1796
    %v1798 = vpop.xlane.xlu0 %1797
    %v1799 = vadd.f32 %v1714, %v1715
    %1800 = vadd.xlane.f32.xlu0 %v1799
    %v1801 = vpop.xlane.xlu0 %1800
    %v1802 = vadd.f32 %v1716, %v1717
    %1803 = vadd.xlane.f32.xlu0 %v1802
    %v1804 = vpop.xlane.xlu0 %1803
    %v1805 = vadd.f32 %v1718, %v1719
    %1806 = vadd.xlane.f32.xlu0 %v1805
    %v1807 = vpop.xlane.xlu0 %1806
    %v1808 = vadd.f32 %v1720, %v1721
    %1809 = vadd.xlane.f32.xlu0 %v1808
    %v1810 = vpop.xlane.xlu0 %1809
    %v1811 = vadd.f32 %v1722, %v1723
    %1812 = vadd.xlane.f32.xlu0 %v1811
    %v1813 = vpop.xlane.xlu0 %1812
    %v1814 = vadd.f32 %v1724, %v1725
    %1815 = vadd.xlane.f32.xlu0 %v1814
    %v1816 = vpop.xlane.xlu0 %1815
    %v1817 = vadd.f32 %v1726, %v1727
    %1818 = vadd.xlane.f32.xlu0 %v1817
    %v1819 = vpop.xlane.xlu0 %1818
    %v1820 = vadd.f32 %v1728, %v1729
    %1821 = vadd.xlane.f32.xlu0 %v1820
    %v1822 = vpop.xlane.xlu0 %1821
    %v1823 = vadd.f32 %v1730, %v1731
    %1824 = vadd.xlane.f32.xlu0 %v1823
    %v1825 = vpop.xlane.xlu0 %1824
    %v1826 = vadd.f32 %v1732, %v1733
    %1827 = vadd.xlane.f32.xlu0 %v1826
    %v1828 = vpop.xlane.xlu0 %1827
    %v1829 = vadd.f32 %v1734, %v1735
    %1830 = vadd.xlane.f32.xlu0 %v1829
    %v1831 = vpop.xlane.xlu0 %1830
    %1832 = vxpose.xlu0.b32.start [1/16] %v1738, 128
    %1833 = vxpose.xlu0.b32.cont [2/16] %v1741, 128
    %1834 = vxpose.xlu0.b32.cont [3/16] %v1744, 128
    %1835 = vxpose.xlu0.b32.cont [4/16] %v1747, 128
    %1836 = vxpose.xlu0.b32.cont [5/16] %v1750, 128
    %1837 = vxpose.xlu0.b32.cont [6/16] %v1753, 128
    %1838 = vxpose.xlu0.b32.cont [7/16] %v1756, 128
    %1839 = vxpose.xlu0.b32.cont [8/16] %v1759, 128
    %1840 = vxpose.xlu0.b32.cont [9/16] %v1762, 128
    %1841 = vxpose.xlu0.b32.cont [10/16] %v1765, 128
    %1842 = vxpose.xlu0.b32.cont [11/16] %v1768, 128
    %1843 = vxpose.xlu0.b32.cont [12/16] %v1771, 128
    %1844 = vxpose.xlu0.b32.cont [13/16] %v1774, 128
    %1845 = vxpose.xlu0.b32.cont [14/16] %v1777, 128
    %1846 = vxpose.xlu0.b32.cont [15/16] %v1780, 128
    %1847 = vxpose.xlu0.b32.end [16/16] %v1783, 128
    %v1848 = vpop.trf.xlu0
    %v1849 = vpop.trf.xlu0
    %v1850 = vpop.trf.xlu0
    %v1851 = vpop.trf.xlu0
    %v1852 = vpop.trf.xlu0
    %v1853 = vpop.trf.xlu0
    %v1854 = vpop.trf.xlu0
    %v1855 = vpop.trf.xlu0
    %v1856 = vpop.trf.xlu0
    %v1857 = vpop.trf.xlu0
    %v1858 = vpop.trf.xlu0
    %v1859 = vpop.trf.xlu0
    %v1860 = vpop.trf.xlu0
    %v1861 = vpop.trf.xlu0
    %v1862 = vpop.trf.xlu0
    %v1863 = vpop.trf.xlu0
    %1864 = vxpose.xlu0.b32.start [1/16] %v1786, 128
    %1865 = vxpose.xlu0.b32.cont [2/16] %v1789, 128
    %1866 = vxpose.xlu0.b32.cont [3/16] %v1792, 128
    %1867 = vxpose.xlu0.b32.cont [4/16] %v1795, 128
    %1868 = vxpose.xlu0.b32.cont [5/16] %v1798, 128
    %1869 = vxpose.xlu0.b32.cont [6/16] %v1801, 128
    %1870 = vxpose.xlu0.b32.cont [7/16] %v1804, 128
    %1871 = vxpose.xlu0.b32.cont [8/16] %v1807, 128
    %1872 = vxpose.xlu0.b32.cont [9/16] %v1810, 128
    %1873 = vxpose.xlu0.b32.cont [10/16] %v1813, 128
    %1874 = vxpose.xlu0.b32.cont [11/16] %v1816, 128
    %1875 = vxpose.xlu0.b32.cont [12/16] %v1819, 128
    %1876 = vxpose.xlu0.b32.cont [13/16] %v1822, 128
    %1877 = vxpose.xlu0.b32.cont [14/16] %v1825, 128
    %1878 = vxpose.xlu0.b32.cont [15/16] %v1828, 128
    %1879 = vxpose.xlu0.b32.end [16/16] %v1831, 128
    %v1880 = vpop.trf.xlu0
    %v1881 = vpop.trf.xlu0
    %v1882 = vpop.trf.xlu0
    %v1883 = vpop.trf.xlu0
    %v1884 = vpop.trf.xlu0
    %v1885 = vpop.trf.xlu0
    %v1886 = vpop.trf.xlu0
    %v1887 = vpop.trf.xlu0
    %v1888 = vpop.trf.xlu0
    %v1889 = vpop.trf.xlu0
    %v1890 = vpop.trf.xlu0
    %v1891 = vpop.trf.xlu0
    %v1892 = vpop.trf.xlu0
    %v1893 = vpop.trf.xlu0
    %v1894 = vpop.trf.xlu0
    %v1895 = vpop.trf.xlu0
    %s1896 = sld [smem:[#allocation2]]
    %v1897 = vstv %s1896
    %v1898 = vadd.f32 %v1848, %v1897
    %v1899 = vadd.f32 %v1880, %v1897
    %v1902 = vcombine.low %v1898, %v1899
    %v1904 = vunpack.c.l.s4 1966171168
    %v1905 = vunpack.c.0.s8 %v1904
    %v1906 = vlaneseq
    %v1907 = vshrl.u32 %v1906, 7
    %v1908 = vsub.s32 %v1905, %v1907
    %v1909 = vrot.slane %v1902, %v1908
    %v1911 = vunpack.c.l.s4 1966171168
    %v1912 = vunpack.c.0.s8 %v1911
    %v1913 = vlaneseq
    %v1914 = vshrl.u32 %v1913, 7
    %v1915 = vsub.s32 %v1912, %v1914
    %v1916 = vrot.slane %v1909, %v1915
    %v1918 = vlaneseq
    %vm1919 = vcmp.ge.s32.totalorder %v1918, 0
    %vm1920 = vcmp.lt.s32.totalorder %v1918, 256
    %vm1921 = vmand %vm1919, %vm1920
    %1922 = vst.msk [vmem:[%s7] sm:$0x3] %vm1921, %v1916
    // Predicated region
    $region42: #{critic_forward.1} parent=1 // pred_check
      _
    $region43: #{critic_forward.1} parent=1 // pred_check_branch
      %1924 = sbr.rel (0) target = $region45
    $region44: #{critic_forward.1} parent=1 // pred_region
      _
    $region45: #{critic_forward.1} parent=1 // pred_fallthru
      _
    // Predicated region
    $region46: #{critic_forward.1} parent=1 // pred_check
      _
    $region47: #{critic_forward.1} parent=1 // pred_check_branch
      %1926 = sbr.rel (0) target = $region49
    $region48: #{critic_forward.1} parent=1 // pred_region
      _
    $region49: #{critic_forward.1} parent=1 // pred_fallthru
      _
    %1927 = vsyncpa [#allocation4], 1
    %1928 = vsyncpa [#allocation6], 1

</llo_original>
